<compile_context>
chip_gen: v6e
topology: v6e:2x2x1
jax: 0.10.0
libtpu: 0.0.40
codegen_flags: <defaults>
</compile_context>

<pallas_src>
import jax
import jax.numpy as jnp
from jax.experimental import pallas as pl
from jax.experimental.pallas import tpu as pltpu


def _downsample_conv_kernel(x_ref, w_ref, b_ref, o_ref):
    """Fused im2col + GEMM for a 3x3 / stride-2 / pad-1 conv.

    x_ref: (N, Hp, Wp, C)    f32  padded NHWC activation (whole array in VMEM)
    w_ref: (9, C, Cout)      f32  conv weight, one (C, Cout) matrix per tap
    b_ref: (1, Cout)         f32  bias
    o_ref: (N, Ho, Wo, Cout) f32  NHWC output
    """
    n, ho, wo, cout = o_ref.shape
    c = x_ref.shape[-1]
    m = n * ho * wo

    acc = jnp.zeros((m, cout), dtype=jnp.float32)
    # 9 taps, fully unrolled at trace time.  Each tap is a stride-2 VMEM read
    # over the two spatial dims (W is the sublane dim -> native sublane-strided
    # load; C stays contiguous on lanes) followed by a small f32 MXU dot that
    # accumulates into `acc`.
    for dy in range(3):
        for dx in range(3):
            tap = x_ref[:, pl.ds(dy, ho, stride=2), pl.ds(dx, wo, stride=2), :]
            tap2d = tap.reshape(m, c)                     # (M, C): collapse leading dims
            acc = acc + jnp.dot(tap2d, w_ref[dy * 3 + dx],
                                preferred_element_type=jnp.float32)
    acc = acc + b_ref[...]                                # (1, Cout) broadcast
    o_ref[...] = acc.reshape(n, ho, wo, cout).astype(o_ref.dtype)


def downsample_forward(x_nchw, weight, bias):
    """Conv2d(Cin, Cout, k=3, stride=2, padding=1) == Downsample.op (use_conv=True, dims=2)."""
    N, C, H, W = x_nchw.shape
    Cout = weight.shape[0]
    K, S, P = 3, 2, 1
    Ho = (H + 2 * P - K) // S + 1
    Wo = (W + 2 * P - K) // S + 1

    # Input layout plumbing (2 XLA ops): NCHW -> NHWC (channels on lanes, W on
    # sublanes so the in-kernel stride-2 reads are sublane-strided), then pad.
    x = jnp.transpose(x_nchw, (0, 2, 3, 1)).astype(jnp.float32)
    x_pad = jnp.pad(x, ((0, 0), (P, P), (P, P), (0, 0)))

    # Parameter relayout (tiny; one-time / cached with the params in a real model):
    # (Cout, Cin, ky, kx) -> (ky*3+kx, Cin, Cout); bias -> (1, Cout).
    w9 = jnp.transpose(weight, (2, 3, 1, 0)).reshape(K * K, C, Cout).astype(jnp.float32)
    b2d = bias.astype(jnp.float32).reshape(1, Cout)

    out_nhwc = pl.pallas_call(
        _downsample_conv_kernel,
        out_shape=jax.ShapeDtypeStruct((N, Ho, Wo, Cout), jnp.float32),
        in_specs=[
            pl.BlockSpec(memory_space=pltpu.MemorySpace.VMEM),
            pl.BlockSpec(memory_space=pltpu.MemorySpace.VMEM),
            pl.BlockSpec(memory_space=pltpu.MemorySpace.VMEM),
        ],
        out_specs=pl.BlockSpec(memory_space=pltpu.MemorySpace.VMEM),
    )(x_pad, w9, b2d)

    # Back to the module's NCHW contract (one small transpose on ~2 KB; a
    # downstream NHWC consumer could take out_nhwc directly and skip it).
    return jnp.transpose(out_nhwc, (0, 3, 1, 2)).astype(x_nchw.dtype)


if __name__ == "__main__":
    channels = 4
    N, H, W = 2, 16, 16

    key = jax.random.PRNGKey(0)
    kx, kw, kb = jax.random.split(key, 3)

    x = jax.random.normal(kx, (N, channels, H, W), dtype=jnp.float32)
    # Conv2d(channels, channels, 3) parameter shapes; deterministic synthetic init.
    fan_in = channels * 3 * 3
    bound = 1.0 / (fan_in ** 0.5)
    weight = jax.random.uniform(kw, (channels, channels, 3, 3),
                                minval=-bound, maxval=bound, dtype=jnp.float32)
    bias = jax.random.uniform(kb, (channels,),
                              minval=-bound, maxval=bound, dtype=jnp.float32)

    y = downsample_forward(x, weight, bias)
    jax.block_until_ready(y)

    # Reference: strict f32 conv (Precision.HIGHEST), matching PyTorch's f32
    # Conv2d semantics.  The kernel keeps f32 operands; the tolerance below
    # covers the worst case where the backend's default f32 matmul path rounds
    # MXU operands (<= ~1e-2 abs at these magnitudes over a K=36 contraction),
    # while any layout/indexing bug would produce O(1) errors and fail.
    y_ref = jax.lax.conv_general_dilated(
        x, weight, window_strides=(2, 2), padding=((1, 1), (1, 1)),
        dimension_numbers=("NCHW", "OIHW", "NCHW"),
        precision=jax.lax.Precision.HIGHEST,
    ) + bias.reshape(1, channels, 1, 1)

    assert y.shape == (N, channels, H // 2, W // 2)
    assert jnp.allclose(y, y_ref, atol=2e-2, rtol=2e-2), \
        float(jnp.max(jnp.abs(y - y_ref)))

    print("KERNEL_OK")
</pallas_src>

<mosaic_0001>
module attributes {stable_mosaic.version = 11 : i64} {
  func.func @_downsample_conv_kernel(%arg0: memref<2x18x18x4xf32, #tpu.memory_space<vmem>>, %arg1: memref<9x4x4xf32, #tpu.memory_space<vmem>>, %arg2: memref<1x4xf32, #tpu.memory_space<vmem>>, %arg3: memref<2x8x8x4xf32, #tpu.memory_space<vmem>>) attributes {dimension_semantics = [], scalar_prefetch = 0 : i64, scratch_operands = 0 : i64, tpu.core_type = #tpu.core_type<tc>} {
    %cst = arith.constant 0.000000e+00 : f32
    %0 = vector.broadcast %cst : f32 to vector<128x4xf32>
    %c0 = arith.constant 0 : index
    %c0_0 = arith.constant 0 : index
    %c0_1 = arith.constant 0 : index
    %c0_2 = arith.constant 0 : index
    %1 = tpu.strided_load %arg0[%c0, %c0_0, %c0_1, %c0_2] {strides = array<i32: 1, 2, 2, 1>} : memref<2x18x18x4xf32, #tpu.memory_space<vmem>>, vector<2x8x8x4xf32>
    %2 = vector.shape_cast %1 : vector<2x8x8x4xf32> to vector<128x4xf32>
    %c0_3 = arith.constant 0 : index
    %c0_4 = arith.constant 0 : index
    %c0_5 = arith.constant 0 : index
    %3 = vector.load %arg1[%c0_3, %c0_4, %c0_5] : memref<9x4x4xf32, #tpu.memory_space<vmem>>, vector<1x4x4xf32>
    %4 = vector.shape_cast %3 : vector<1x4x4xf32> to vector<4x4xf32>
    %cst_6 = arith.constant dense<0.000000e+00> : vector<128x4xf32>
    %5 = tpu.matmul %2, %4, %cst_6 {dimension_numbers = #tpu.dot_dimension_numbers<[1], [0], [0], [1], [0, 0, 1, 1], [], []>} : vector<128x4xf32>, vector<4x4xf32>, vector<128x4xf32> -> vector<128x4xf32>
    %6 = arith.addf %0, %5 : vector<128x4xf32>
    %c0_7 = arith.constant 0 : index
    %c0_8 = arith.constant 0 : index
    %c1 = arith.constant 1 : index
    %c0_9 = arith.constant 0 : index
    %7 = tpu.strided_load %arg0[%c0_7, %c0_8, %c1, %c0_9] {strides = array<i32: 1, 2, 2, 1>} : memref<2x18x18x4xf32, #tpu.memory_space<vmem>>, vector<2x8x8x4xf32>
    %8 = vector.shape_cast %7 : vector<2x8x8x4xf32> to vector<128x4xf32>
    %c1_10 = arith.constant 1 : index
    %c0_11 = arith.constant 0 : index
    %c0_12 = arith.constant 0 : index
    %9 = vector.load %arg1[%c1_10, %c0_11, %c0_12] : memref<9x4x4xf32, #tpu.memory_space<vmem>>, vector<1x4x4xf32>
    %10 = vector.shape_cast %9 : vector<1x4x4xf32> to vector<4x4xf32>
    %cst_13 = arith.constant dense<0.000000e+00> : vector<128x4xf32>
    %11 = tpu.matmul %8, %10, %cst_13 {dimension_numbers = #tpu.dot_dimension_numbers<[1], [0], [0], [1], [0, 0, 1, 1], [], []>} : vector<128x4xf32>, vector<4x4xf32>, vector<128x4xf32> -> vector<128x4xf32>
    %12 = arith.addf %6, %11 : vector<128x4xf32>
    %c0_14 = arith.constant 0 : index
    %c0_15 = arith.constant 0 : index
    %c2 = arith.constant 2 : index
    %c0_16 = arith.constant 0 : index
    %13 = tpu.strided_load %arg0[%c0_14, %c0_15, %c2, %c0_16] {strides = array<i32: 1, 2, 2, 1>} : memref<2x18x18x4xf32, #tpu.memory_space<vmem>>, vector<2x8x8x4xf32>
    %14 = vector.shape_cast %13 : vector<2x8x8x4xf32> to vector<128x4xf32>
    %c2_17 = arith.constant 2 : index
    %c0_18 = arith.constant 0 : index
    %c0_19 = arith.constant 0 : index
    %15 = vector.load %arg1[%c2_17, %c0_18, %c0_19] : memref<9x4x4xf32, #tpu.memory_space<vmem>>, vector<1x4x4xf32>
    %16 = vector.shape_cast %15 : vector<1x4x4xf32> to vector<4x4xf32>
    %cst_20 = arith.constant dense<0.000000e+00> : vector<128x4xf32>
    %17 = tpu.matmul %14, %16, %cst_20 {dimension_numbers = #tpu.dot_dimension_numbers<[1], [0], [0], [1], [0, 0, 1, 1], [], []>} : vector<128x4xf32>, vector<4x4xf32>, vector<128x4xf32> -> vector<128x4xf32>
    %18 = arith.addf %12, %17 : vector<128x4xf32>
    %c0_21 = arith.constant 0 : index
    %c1_22 = arith.constant 1 : index
    %c0_23 = arith.constant 0 : index
    %c0_24 = arith.constant 0 : index
    %19 = tpu.strided_load %arg0[%c0_21, %c1_22, %c0_23, %c0_24] {strides = array<i32: 1, 2, 2, 1>} : memref<2x18x18x4xf32, #tpu.memory_space<vmem>>, vector<2x8x8x4xf32>
    %20 = vector.shape_cast %19 : vector<2x8x8x4xf32> to vector<128x4xf32>
    %c3 = arith.constant 3 : index
    %c0_25 = arith.constant 0 : index
    %c0_26 = arith.constant 0 : index
    %21 = vector.load %arg1[%c3, %c0_25, %c0_26] : memref<9x4x4xf32, #tpu.memory_space<vmem>>, vector<1x4x4xf32>
    %22 = vector.shape_cast %21 : vector<1x4x4xf32> to vector<4x4xf32>
    %cst_27 = arith.constant dense<0.000000e+00> : vector<128x4xf32>
    %23 = tpu.matmul %20, %22, %cst_27 {dimension_numbers = #tpu.dot_dimension_numbers<[1], [0], [0], [1], [0, 0, 1, 1], [], []>} : vector<128x4xf32>, vector<4x4xf32>, vector<128x4xf32> -> vector<128x4xf32>
    %24 = arith.addf %18, %23 : vector<128x4xf32>
    %c0_28 = arith.constant 0 : index
    %c1_29 = arith.constant 1 : index
    %c1_30 = arith.constant 1 : index
    %c0_31 = arith.constant 0 : index
    %25 = tpu.strided_load %arg0[%c0_28, %c1_29, %c1_30, %c0_31] {strides = array<i32: 1, 2, 2, 1>} : memref<2x18x18x4xf32, #tpu.memory_space<vmem>>, vector<2x8x8x4xf32>
    %26 = vector.shape_cast %25 : vector<2x8x8x4xf32> to vector<128x4xf32>
    %c4 = arith.constant 4 : index
    %c0_32 = arith.constant 0 : index
    %c0_33 = arith.constant 0 : index
    %27 = vector.load %arg1[%c4, %c0_32, %c0_33] : memref<9x4x4xf32, #tpu.memory_space<vmem>>, vector<1x4x4xf32>
    %28 = vector.shape_cast %27 : vector<1x4x4xf32> to vector<4x4xf32>
    %cst_34 = arith.constant dense<0.000000e+00> : vector<128x4xf32>
    %29 = tpu.matmul %26, %28, %cst_34 {dimension_numbers = #tpu.dot_dimension_numbers<[1], [0], [0], [1], [0, 0, 1, 1], [], []>} : vector<128x4xf32>, vector<4x4xf32>, vector<128x4xf32> -> vector<128x4xf32>
    %30 = arith.addf %24, %29 : vector<128x4xf32>
    %c0_35 = arith.constant 0 : index
    %c1_36 = arith.constant 1 : index
    %c2_37 = arith.constant 2 : index
    %c0_38 = arith.constant 0 : index
    %31 = tpu.strided_load %arg0[%c0_35, %c1_36, %c2_37, %c0_38] {strides = array<i32: 1, 2, 2, 1>} : memref<2x18x18x4xf32, #tpu.memory_space<vmem>>, vector<2x8x8x4xf32>
    %32 = vector.shape_cast %31 : vector<2x8x8x4xf32> to vector<128x4xf32>
    %c5 = arith.constant 5 : index
    %c0_39 = arith.constant 0 : index
    %c0_40 = arith.constant 0 : index
    %33 = vector.load %arg1[%c5, %c0_39, %c0_40] : memref<9x4x4xf32, #tpu.memory_space<vmem>>, vector<1x4x4xf32>
    %34 = vector.shape_cast %33 : vector<1x4x4xf32> to vector<4x4xf32>
    %cst_41 = arith.constant dense<0.000000e+00> : vector<128x4xf32>
    %35 = tpu.matmul %32, %34, %cst_41 {dimension_numbers = #tpu.dot_dimension_numbers<[1], [0], [0], [1], [0, 0, 1, 1], [], []>} : vector<128x4xf32>, vector<4x4xf32>, vector<128x4xf32> -> vector<128x4xf32>
    %36 = arith.addf %30, %35 : vector<128x4xf32>
    %c0_42 = arith.constant 0 : index
    %c2_43 = arith.constant 2 : index
    %c0_44 = arith.constant 0 : index
    %c0_45 = arith.constant 0 : index
    %37 = tpu.strided_load %arg0[%c0_42, %c2_43, %c0_44, %c0_45] {strides = array<i32: 1, 2, 2, 1>} : memref<2x18x18x4xf32, #tpu.memory_space<vmem>>, vector<2x8x8x4xf32>
    %38 = vector.shape_cast %37 : vector<2x8x8x4xf32> to vector<128x4xf32>
    %c6 = arith.constant 6 : index
    %c0_46 = arith.constant 0 : index
    %c0_47 = arith.constant 0 : index
    %39 = vector.load %arg1[%c6, %c0_46, %c0_47] : memref<9x4x4xf32, #tpu.memory_space<vmem>>, vector<1x4x4xf32>
    %40 = vector.shape_cast %39 : vector<1x4x4xf32> to vector<4x4xf32>
    %cst_48 = arith.constant dense<0.000000e+00> : vector<128x4xf32>
    %41 = tpu.matmul %38, %40, %cst_48 {dimension_numbers = #tpu.dot_dimension_numbers<[1], [0], [0], [1], [0, 0, 1, 1], [], []>} : vector<128x4xf32>, vector<4x4xf32>, vector<128x4xf32> -> vector<128x4xf32>
    %42 = arith.addf %36, %41 : vector<128x4xf32>
    %c0_49 = arith.constant 0 : index
    %c2_50 = arith.constant 2 : index
    %c1_51 = arith.constant 1 : index
    %c0_52 = arith.constant 0 : index
    %43 = tpu.strided_load %arg0[%c0_49, %c2_50, %c1_51, %c0_52] {strides = array<i32: 1, 2, 2, 1>} : memref<2x18x18x4xf32, #tpu.memory_space<vmem>>, vector<2x8x8x4xf32>
    %44 = vector.shape_cast %43 : vector<2x8x8x4xf32> to vector<128x4xf32>
    %c7 = arith.constant 7 : index
    %c0_53 = arith.constant 0 : index
    %c0_54 = arith.constant 0 : index
    %45 = vector.load %arg1[%c7, %c0_53, %c0_54] : memref<9x4x4xf32, #tpu.memory_space<vmem>>, vector<1x4x4xf32>
    %46 = vector.shape_cast %45 : vector<1x4x4xf32> to vector<4x4xf32>
    %cst_55 = arith.constant dense<0.000000e+00> : vector<128x4xf32>
    %47 = tpu.matmul %44, %46, %cst_55 {dimension_numbers = #tpu.dot_dimension_numbers<[1], [0], [0], [1], [0, 0, 1, 1], [], []>} : vector<128x4xf32>, vector<4x4xf32>, vector<128x4xf32> -> vector<128x4xf32>
    %48 = arith.addf %42, %47 : vector<128x4xf32>
    %c0_56 = arith.constant 0 : index
    %c2_57 = arith.constant 2 : index
    %c2_58 = arith.constant 2 : index
    %c0_59 = arith.constant 0 : index
    %49 = tpu.strided_load %arg0[%c0_56, %c2_57, %c2_58, %c0_59] {strides = array<i32: 1, 2, 2, 1>} : memref<2x18x18x4xf32, #tpu.memory_space<vmem>>, vector<2x8x8x4xf32>
    %50 = vector.shape_cast %49 : vector<2x8x8x4xf32> to vector<128x4xf32>
    %c8 = arith.constant 8 : index
    %c0_60 = arith.constant 0 : index
    %c0_61 = arith.constant 0 : index
    %51 = vector.load %arg1[%c8, %c0_60, %c0_61] : memref<9x4x4xf32, #tpu.memory_space<vmem>>, vector<1x4x4xf32>
    %52 = vector.shape_cast %51 : vector<1x4x4xf32> to vector<4x4xf32>
    %cst_62 = arith.constant dense<0.000000e+00> : vector<128x4xf32>
    %53 = tpu.matmul %50, %52, %cst_62 {dimension_numbers = #tpu.dot_dimension_numbers<[1], [0], [0], [1], [0, 0, 1, 1], [], []>} : vector<128x4xf32>, vector<4x4xf32>, vector<128x4xf32> -> vector<128x4xf32>
    %54 = arith.addf %48, %53 : vector<128x4xf32>
    %c0_63 = arith.constant 0 : index
    %c0_64 = arith.constant 0 : index
    %55 = vector.load %arg2[%c0_63, %c0_64] : memref<1x4xf32, #tpu.memory_space<vmem>>, vector<1x4xf32>
    %56 = vector.broadcast %55 : vector<1x4xf32> to vector<128x4xf32>
    %57 = arith.addf %54, %56 : vector<128x4xf32>
    %58 = vector.shape_cast %57 : vector<128x4xf32> to vector<2x8x8x4xf32>
    %c0_65 = arith.constant 0 : index
    %c0_66 = arith.constant 0 : index
    %c0_67 = arith.constant 0 : index
    %c0_68 = arith.constant 0 : index
    %59 = vector.load %arg3[%c0_65, %c0_66, %c0_67, %c0_68] : memref<2x8x8x4xf32, #tpu.memory_space<vmem>>, vector<2x8x8x4xf32>
    tpu.vector_store %arg3[%c0_65, %c0_66, %c0_67, %c0_68], %58 {strides = array<i32>} : memref<2x8x8x4xf32, #tpu.memory_space<vmem>>, vector<2x8x8x4xf32>,
    return
  }
}

</mosaic_0001>

<llo_original>
// kernel: tpu_custom_call.1
$region0: #{tpu_custom_call.1}
  #allocation0 [shape = 'u32[]', space=smem, size = 0x4, offset = 0x4, fixed_abs, tag = 'smem constant byte address 0x4 - core index']
  #allocation1 [shape = 'u32[144,128]{1,0:T(1,128)}', space=vmem, size = 0x12000, scoped, tag = 'internal scratch']
  %s0 = inlined_call_operand.vmem [shape: f32[2,18,18,4], index: 0, kind: input, shape index: {}]
  %s1 = inlined_call_operand.vmem [shape: f32[9,4,4], index: 1, kind: input, shape index: {}]
  %s2 = inlined_call_operand.vmem [shape: f32[1,4], index: 2, kind: input, shape index: {}]
  %s3 = inlined_call_operand.vmem [shape: f32[2,8,8,4], index: 3, kind: output, shape index: {}]
  %s4 = sld [smem:[#allocation0]]
  $region22: #{tpu_custom_call.1} parent=0
    _
  %s6 = ssub.s32 1, %s4
  %s7 = scalar_select 0, %s6, %s4
  // Predicated region
  $region2: #{tpu_custom_call.1} parent=0 // pred_check
    _
  $region3: #{tpu_custom_call.1} parent=0 // pred_check_branch
    %9 = sbr.rel (0) target = $region5
  $region4: #{tpu_custom_call.1} parent=0 // pred_region
    _
  $region5: #{tpu_custom_call.1} parent=0 // pred_fallthru
    _
  // Predicated region
  $region6: #{tpu_custom_call.1} parent=0 // pred_check
    _
  $region7: #{tpu_custom_call.1} parent=0 // pred_check_branch
    %11 = sbr.rel (0) target = $region9
  $region8: #{tpu_custom_call.1} parent=0 // pred_region
    _
  $region9: #{tpu_custom_call.1} parent=0 // pred_fallthru
    _
  // Predicated region
  $region10: #{tpu_custom_call.1} parent=0 // pred_check
    _
  $region11: #{tpu_custom_call.1} parent=0 // pred_check_branch
    %13 = sbr.rel (0) target = $region13
  $region12: #{tpu_custom_call.1} parent=0 // pred_region
    _
  $region13: #{tpu_custom_call.1} parent=0 // pred_fallthru
    _
  %v14 = vld [vmem:[%s0] ss:$2 sm:$0xff]
  %s15 = scalar_lea.vmem %s0, 48
  %v16 = vld [vmem:[%s15] ss:$2 sm:$0xff]
  %s17 = scalar_lea.vmem %s0, 96
  %v18 = vld [vmem:[%s17] ss:$2 sm:$0xff]
  %s19 = scalar_lea.vmem %s0, 144
  %v20 = vld [vmem:[%s19] ss:$2 sm:$0xff]
  %s21 = scalar_lea.vmem %s0, 192
  %v22 = vld [vmem:[%s21] ss:$2 sm:$0xff]
  %s23 = scalar_lea.vmem %s0, 240
  %v24 = vld [vmem:[%s23] ss:$2 sm:$0xff]
  %s25 = scalar_lea.vmem %s0, 288
  %v26 = vld [vmem:[%s25] ss:$2 sm:$0xff]
  %s27 = scalar_lea.vmem %s0, 336
  %v28 = vld [vmem:[%s27] ss:$2 sm:$0xff]
  %s29 = scalar_lea.vmem %s0, 432
  %v30 = vld [vmem:[%s29] ss:$2 sm:$0xff]
  %s31 = scalar_lea.vmem %s0, 480
  %v32 = vld [vmem:[%s31] ss:$2 sm:$0xff]
  %s33 = scalar_lea.vmem %s0, 528
  %v34 = vld [vmem:[%s33] ss:$2 sm:$0xff]
  %s35 = scalar_lea.vmem %s0, 576
  %v36 = vld [vmem:[%s35] ss:$2 sm:$0xff]
  %s37 = scalar_lea.vmem %s0, 624
  %v38 = vld [vmem:[%s37] ss:$2 sm:$0xff]
  %s39 = scalar_lea.vmem %s0, 672
  %v40 = vld [vmem:[%s39] ss:$2 sm:$0xff]
  %s41 = scalar_lea.vmem %s0, 720
  %v42 = vld [vmem:[%s41] ss:$2 sm:$0xff]
  %s43 = scalar_lea.vmem %s0, 768
  %v44 = vld [vmem:[%s43] ss:$2 sm:$0xff]
  %v45 = vld [vmem:[%s1] sm:$0xf]
  %s46 = scalar_lea.vmem %s0, 1
  %v47 = vld [vmem:[%s46] ss:$2 sm:$0xff]
  %s48 = scalar_lea.vmem %s0, 49
  %v49 = vld [vmem:[%s48] ss:$2 sm:$0xff]
  %s50 = scalar_lea.vmem %s0, 97
  %v51 = vld [vmem:[%s50] ss:$2 sm:$0xff]
  %s52 = scalar_lea.vmem %s0, 145
  %v53 = vld [vmem:[%s52] ss:$2 sm:$0xff]
  %s54 = scalar_lea.vmem %s0, 193
  %v55 = vld [vmem:[%s54] ss:$2 sm:$0xff]
  %s56 = scalar_lea.vmem %s0, 241
  %v57 = vld [vmem:[%s56] ss:$2 sm:$0xff]
  %s58 = scalar_lea.vmem %s0, 289
  %v59 = vld [vmem:[%s58] ss:$2 sm:$0xff]
  %s60 = scalar_lea.vmem %s0, 337
  %v61 = vld [vmem:[%s60] ss:$2 sm:$0xff]
  %s62 = scalar_lea.vmem %s0, 433
  %v63 = vld [vmem:[%s62] ss:$2 sm:$0xff]
  %s64 = scalar_lea.vmem %s0, 481
  %v65 = vld [vmem:[%s64] ss:$2 sm:$0xff]
  %s66 = scalar_lea.vmem %s0, 529
  %v67 = vld [vmem:[%s66] ss:$2 sm:$0xff]
  %s68 = scalar_lea.vmem %s0, 577
  %v69 = vld [vmem:[%s68] ss:$2 sm:$0xff]
  %s70 = scalar_lea.vmem %s0, 625
  %v71 = vld [vmem:[%s70] ss:$2 sm:$0xff]
  %s72 = scalar_lea.vmem %s0, 673
  %v73 = vld [vmem:[%s72] ss:$2 sm:$0xff]
  %s74 = scalar_lea.vmem %s0, 721
  %v75 = vld [vmem:[%s74] ss:$2 sm:$0xff]
  %s76 = scalar_lea.vmem %s0, 769
  %v77 = vld [vmem:[%s76] ss:$2 sm:$0xff]
  %s78 = scalar_lea.vmem %s1, 4
  %v79 = vld [vmem:[%s78] sm:$0xf]
  %vm80 = vcmask 31744
  %v82 = vsel %vm80, %v47, 0
  %v85 = vsel %vm80, %v49, 0
  %v88 = vsel %vm80, %v51, 0
  %v91 = vsel %vm80, %v53, 0
  %v94 = vsel %vm80, %v55, 0
  %v97 = vsel %vm80, %v57, 0
  %v100 = vsel %vm80, %v59, 0
  %v103 = vsel %vm80, %v61, 0
  %v106 = vsel %vm80, %v63, 0
  %v109 = vsel %vm80, %v65, 0
  %v112 = vsel %vm80, %v67, 0
  %v115 = vsel %vm80, %v69, 0
  %v118 = vsel %vm80, %v71, 0
  %v121 = vsel %vm80, %v73, 0
  %v124 = vsel %vm80, %v75, 0
  %v127 = vsel %vm80, %v77, 0
  %vm129 = vcmask 1043456
  %v131 = vsel %vm129, %v79, 0
  %133 = vmatprep.subr.mxu0 0.0
  %134 = vmatpush1.msra.mxu0 0.0
  %135 = vmatprep.subr.mxu0 0.0
  %136 = vmatpush1.msra.mxu0 0.0
  %137 = vmatprep.subr.mxu0 0.0
  %138 = vmatpush1.msra.mxu0 0.0
  %139 = vmatprep.subr.mxu0 0.0
  %140 = vmatpush1.msra.mxu0 0.0
  %141 = vmatprep.subr.mxu0 0.0
  %142 = vmatpush1.msra.mxu0 0.0
  %143 = vmatprep.subr.mxu0 0.0
  %144 = vmatpush1.msra.mxu0 0.0
  %145 = vmatprep.subr.mxu0 0.0
  %146 = vmatpush1.msra.mxu0 0.0
  %147 = vmatprep.subr.mxu0 0.0
  %148 = vmatpush1.msra.mxu0 0.0
  %149 = vmatprep.subr.mxu0 0.0
  %150 = vmatpush1.msra.mxu0 0.0
  %151 = vmatprep.subr.mxu0 0.0
  %152 = vmatpush1.msra.mxu0 0.0
  %153 = vmatprep.subr.mxu0 0.0
  %154 = vmatpush1.msra.mxu0 0.0
  %155 = vmatprep.subr.mxu0 0.0
  %156 = vmatpush1.msra.mxu0 0.0
  %157 = vmatprep.subr.mxu0 0.0
  %158 = vmatpush1.msra.mxu0 0.0
  %159 = vmatprep.subr.mxu0 0.0
  %160 = vmatpush1.msra.mxu0 0.0
  %161 = vmatprep.subr.mxu0 0.0
  %162 = vmatpush1.msra.mxu0 0.0
  %163 = vmatprep.subr.mxu0 0.0
  %164 = vmatpush1.msra.mxu0 %v131
  %165 = vmatprep.subr.mxu0 0.0
  %166 = vmatpush2.msra.mxu0 0.0
  %167 = vmatprep.subr.mxu0 0.0
  %168 = vmatpush2.msra.mxu0 0.0
  %169 = vmatprep.subr.mxu0 0.0
  %170 = vmatpush2.msra.mxu0 0.0
  %171 = vmatprep.subr.mxu0 0.0
  %172 = vmatpush2.msra.mxu0 0.0
  %173 = vmatprep.subr.mxu0 0.0
  %174 = vmatpush2.msra.mxu0 0.0
  %175 = vmatprep.subr.mxu0 0.0
  %176 = vmatpush2.msra.mxu0 0.0
  %177 = vmatprep.subr.mxu0 0.0
  %178 = vmatpush2.msra.mxu0 0.0
  %179 = vmatprep.subr.mxu0 0.0
  %180 = vmatpush2.msra.mxu0 0.0
  %181 = vmatprep.subr.mxu0 0.0
  %182 = vmatpush2.msra.mxu0 0.0
  %183 = vmatprep.subr.mxu0 0.0
  %184 = vmatpush2.msra.mxu0 0.0
  %185 = vmatprep.subr.mxu0 0.0
  %186 = vmatpush2.msra.mxu0 0.0
  %187 = vmatprep.subr.mxu0 0.0
  %188 = vmatpush2.msra.mxu0 0.0
  %189 = vmatprep.subr.mxu0 0.0
  %190 = vmatpush2.msra.mxu0 0.0
  %191 = vmatprep.subr.mxu0 0.0
  %192 = vmatpush2.msra.mxu0 0.0
  %193 = vmatprep.subr.mxu0 0.0
  %194 = vmatpush2.msra.mxu0 0.0
  %195 = vmatprep.subr.mxu0 0.0
  %196 = vmatpush2.msra.mxu0 0.0
  %197 = vmatprep.mubr.f32.mxu0 0.0
  %198 = vmatmul.mubr.f32.gmra.mxu0 %v82
  %v199 = vpop.f32.mrf.mxu0
  %v200 = vadd.f32 0.0, %v199
  %v201 = vpop.f32.mrf.mxu0
  %202 = vmatprep.mubr.f32.mxu0 0.0
  %203 = vmatmul.mubr.f32.gmra.mxu0 %v85
  %v204 = vpop.f32.mrf.mxu0
  %v205 = vadd.f32 0.0, %v204
  %v206 = vpop.f32.mrf.mxu0
  %207 = vmatprep.mubr.f32.mxu0 0.0
  %208 = vmatmul.mubr.f32.gmra.mxu0 %v88
  %v209 = vpop.f32.mrf.mxu0
  %v210 = vadd.f32 0.0, %v209
  %v211 = vpop.f32.mrf.mxu0
  %212 = vmatprep.mubr.f32.mxu0 0.0
  %213 = vmatmul.mubr.f32.gmra.mxu0 %v91
  %v214 = vpop.f32.mrf.mxu0
  %v215 = vadd.f32 0.0, %v214
  %v216 = vpop.f32.mrf.mxu0
  %217 = vmatprep.mubr.f32.mxu0 0.0
  %218 = vmatmul.mubr.f32.gmra.mxu0 %v94
  %v219 = vpop.f32.mrf.mxu0
  %v220 = vadd.f32 0.0, %v219
  %v221 = vpop.f32.mrf.mxu0
  %222 = vmatprep.mubr.f32.mxu0 0.0
  %223 = vmatmul.mubr.f32.gmra.mxu0 %v97
  %v224 = vpop.f32.mrf.mxu0
  %v225 = vadd.f32 0.0, %v224
  %v226 = vpop.f32.mrf.mxu0
  %227 = vmatprep.mubr.f32.mxu0 0.0
  %228 = vmatmul.mubr.f32.gmra.mxu0 %v100
  %v229 = vpop.f32.mrf.mxu0
  %v230 = vadd.f32 0.0, %v229
  %v231 = vpop.f32.mrf.mxu0
  %232 = vmatprep.mubr.f32.mxu0 0.0
  %233 = vmatmul.mubr.f32.gmra.mxu0 %v103
  %v234 = vpop.f32.mrf.mxu0
  %v235 = vadd.f32 0.0, %v234
  %v236 = vpop.f32.mrf.mxu0
  %237 = vmatprep.mubr.f32.mxu0 0.0
  %238 = vmatmul.mubr.f32.gmra.mxu0 %v106
  %v239 = vpop.f32.mrf.mxu0
  %v240 = vadd.f32 0.0, %v239
  %v241 = vpop.f32.mrf.mxu0
  %242 = vmatprep.mubr.f32.mxu0 0.0
  %243 = vmatmul.mubr.f32.gmra.mxu0 %v109
  %v244 = vpop.f32.mrf.mxu0
  %v245 = vadd.f32 0.0, %v244
  %v246 = vpop.f32.mrf.mxu0
  %247 = vmatprep.mubr.f32.mxu0 0.0
  %248 = vmatmul.mubr.f32.gmra.mxu0 %v112
  %v249 = vpop.f32.mrf.mxu0
  %v250 = vadd.f32 0.0, %v249
  %v251 = vpop.f32.mrf.mxu0
  %252 = vmatprep.mubr.f32.mxu0 0.0
  %253 = vmatmul.mubr.f32.gmra.mxu0 %v115
  %v254 = vpop.f32.mrf.mxu0
  %v255 = vadd.f32 0.0, %v254
  %v256 = vpop.f32.mrf.mxu0
  %257 = vmatprep.mubr.f32.mxu0 0.0
  %258 = vmatmul.mubr.f32.gmra.mxu0 %v118
  %v259 = vpop.f32.mrf.mxu0
  %v260 = vadd.f32 0.0, %v259
  %v261 = vpop.f32.mrf.mxu0
  %262 = vmatprep.mubr.f32.mxu0 0.0
  %263 = vmatmul.mubr.f32.gmra.mxu0 %v121
  %v264 = vpop.f32.mrf.mxu0
  %v265 = vadd.f32 0.0, %v264
  %v266 = vpop.f32.mrf.mxu0
  %267 = vmatprep.mubr.f32.mxu0 0.0
  %268 = vmatmul.mubr.f32.gmra.mxu0 %v124
  %v269 = vpop.f32.mrf.mxu0
  %v270 = vadd.f32 0.0, %v269
  %v271 = vpop.f32.mrf.mxu0
  %272 = vmatprep.mubr.f32.mxu0 0.0
  %273 = vmatmul.mubr.f32.gmra.mxu0 %v127
  %v274 = vpop.f32.mrf.mxu0
  %v275 = vadd.f32 0.0, %v274
  %v276 = vpop.f32.mrf.mxu0
  %277 = vdwg.mxu0
  %v279 = vsel %vm80, %v14, 0
  %v282 = vsel %vm80, %v16, 0
  %v285 = vsel %vm80, %v18, 0
  %v288 = vsel %vm80, %v20, 0
  %v291 = vsel %vm80, %v22, 0
  %v294 = vsel %vm80, %v24, 0
  %v297 = vsel %vm80, %v26, 0
  %v300 = vsel %vm80, %v28, 0
  %v303 = vsel %vm80, %v30, 0
  %v306 = vsel %vm80, %v32, 0
  %v309 = vsel %vm80, %v34, 0
  %v312 = vsel %vm80, %v36, 0
  %v315 = vsel %vm80, %v38, 0
  %v318 = vsel %vm80, %v40, 0
  %v321 = vsel %vm80, %v42, 0
  %v324 = vsel %vm80, %v44, 0
  %v327 = vsel %vm129, %v45, 0
  %329 = vmatprep.subr.mxu0 0.0
  %330 = vmatpush1.msra.mxu0 0.0
  %331 = vmatprep.subr.mxu0 0.0
  %332 = vmatpush1.msra.mxu0 0.0
  %333 = vmatprep.subr.mxu0 0.0
  %334 = vmatpush1.msra.mxu0 0.0
  %335 = vmatprep.subr.mxu0 0.0
  %336 = vmatpush1.msra.mxu0 0.0
  %337 = vmatprep.subr.mxu0 0.0
  %338 = vmatpush1.msra.mxu0 0.0
  %339 = vmatprep.subr.mxu0 0.0
  %340 = vmatpush1.msra.mxu0 0.0
  %341 = vmatprep.subr.mxu0 0.0
  %342 = vmatpush1.msra.mxu0 0.0
  %343 = vmatprep.subr.mxu0 0.0
  %344 = vmatpush1.msra.mxu0 0.0
  %345 = vmatprep.subr.mxu0 0.0
  %346 = vmatpush1.msra.mxu0 0.0
  %347 = vmatprep.subr.mxu0 0.0
  %348 = vmatpush1.msra.mxu0 0.0
  %349 = vmatprep.subr.mxu0 0.0
  %350 = vmatpush1.msra.mxu0 0.0
  %351 = vmatprep.subr.mxu0 0.0
  %352 = vmatpush1.msra.mxu0 0.0
  %353 = vmatprep.subr.mxu0 0.0
  %354 = vmatpush1.msra.mxu0 0.0
  %355 = vmatprep.subr.mxu0 0.0
  %356 = vmatpush1.msra.mxu0 0.0
  %357 = vmatprep.subr.mxu0 0.0
  %358 = vmatpush1.msra.mxu0 0.0
  %359 = vmatprep.subr.mxu0 0.0
  %360 = vmatpush1.msra.mxu0 %v327
  %361 = vmatprep.subr.mxu0 0.0
  %362 = vmatpush2.msra.mxu0 0.0
  %363 = vmatprep.subr.mxu0 0.0
  %364 = vmatpush2.msra.mxu0 0.0
  %365 = vmatprep.subr.mxu0 0.0
  %366 = vmatpush2.msra.mxu0 0.0
  %367 = vmatprep.subr.mxu0 0.0
  %368 = vmatpush2.msra.mxu0 0.0
  %369 = vmatprep.subr.mxu0 0.0
  %370 = vmatpush2.msra.mxu0 0.0
  %371 = vmatprep.subr.mxu0 0.0
  %372 = vmatpush2.msra.mxu0 0.0
  %373 = vmatprep.subr.mxu0 0.0
  %374 = vmatpush2.msra.mxu0 0.0
  %375 = vmatprep.subr.mxu0 0.0
  %376 = vmatpush2.msra.mxu0 0.0
  %377 = vmatprep.subr.mxu0 0.0
  %378 = vmatpush2.msra.mxu0 0.0
  %379 = vmatprep.subr.mxu0 0.0
  %380 = vmatpush2.msra.mxu0 0.0
  %381 = vmatprep.subr.mxu0 0.0
  %382 = vmatpush2.msra.mxu0 0.0
  %383 = vmatprep.subr.mxu0 0.0
  %384 = vmatpush2.msra.mxu0 0.0
  %385 = vmatprep.subr.mxu0 0.0
  %386 = vmatpush2.msra.mxu0 0.0
  %387 = vmatprep.subr.mxu0 0.0
  %388 = vmatpush2.msra.mxu0 0.0
  %389 = vmatprep.subr.mxu0 0.0
  %390 = vmatpush2.msra.mxu0 0.0
  %391 = vmatprep.subr.mxu0 0.0
  %392 = vmatpush2.msra.mxu0 0.0
  %393 = vmatprep.mubr.f32.mxu0 0.0
  %394 = vmatmul.mubr.f32.gmra.mxu0 %v279
  %v395 = vpop.f32.mrf.mxu0
  %v396 = vadd.f32 %v200, %v395
  %v397 = vpop.f32.mrf.mxu0
  %398 = vmatprep.mubr.f32.mxu0 0.0
  %399 = vmatmul.mubr.f32.gmra.mxu0 %v282
  %v400 = vpop.f32.mrf.mxu0
  %v401 = vadd.f32 %v205, %v400
  %v402 = vpop.f32.mrf.mxu0
  %403 = vmatprep.mubr.f32.mxu0 0.0
  %404 = vmatmul.mubr.f32.gmra.mxu0 %v285
  %v405 = vpop.f32.mrf.mxu0
  %v406 = vadd.f32 %v210, %v405
  %v407 = vpop.f32.mrf.mxu0
  %408 = vmatprep.mubr.f32.mxu0 0.0
  %409 = vmatmul.mubr.f32.gmra.mxu0 %v288
  %v410 = vpop.f32.mrf.mxu0
  %v411 = vadd.f32 %v215, %v410
  %v412 = vpop.f32.mrf.mxu0
  %413 = vmatprep.mubr.f32.mxu0 0.0
  %414 = vmatmul.mubr.f32.gmra.mxu0 %v291
  %v415 = vpop.f32.mrf.mxu0
  %v416 = vadd.f32 %v220, %v415
  %v417 = vpop.f32.mrf.mxu0
  %418 = vmatprep.mubr.f32.mxu0 0.0
  %419 = vmatmul.mubr.f32.gmra.mxu0 %v294
  %v420 = vpop.f32.mrf.mxu0
  %v421 = vadd.f32 %v225, %v420
  %v422 = vpop.f32.mrf.mxu0
  %423 = vmatprep.mubr.f32.mxu0 0.0
  %424 = vmatmul.mubr.f32.gmra.mxu0 %v297
  %v425 = vpop.f32.mrf.mxu0
  %v426 = vadd.f32 %v230, %v425
  %v427 = vpop.f32.mrf.mxu0
  %428 = vmatprep.mubr.f32.mxu0 0.0
  %429 = vmatmul.mubr.f32.gmra.mxu0 %v300
  %v430 = vpop.f32.mrf.mxu0
  %v431 = vadd.f32 %v235, %v430
  %v432 = vpop.f32.mrf.mxu0
  %433 = vmatprep.mubr.f32.mxu0 0.0
  %434 = vmatmul.mubr.f32.gmra.mxu0 %v303
  %v435 = vpop.f32.mrf.mxu0
  %v436 = vadd.f32 %v240, %v435
  %v437 = vpop.f32.mrf.mxu0
  %438 = vmatprep.mubr.f32.mxu0 0.0
  %439 = vmatmul.mubr.f32.gmra.mxu0 %v306
  %v440 = vpop.f32.mrf.mxu0
  %v441 = vadd.f32 %v245, %v440
  %v442 = vpop.f32.mrf.mxu0
  %443 = vmatprep.mubr.f32.mxu0 0.0
  %444 = vmatmul.mubr.f32.gmra.mxu0 %v309
  %v445 = vpop.f32.mrf.mxu0
  %v446 = vadd.f32 %v250, %v445
  %v447 = vpop.f32.mrf.mxu0
  %448 = vmatprep.mubr.f32.mxu0 0.0
  %449 = vmatmul.mubr.f32.gmra.mxu0 %v312
  %v450 = vpop.f32.mrf.mxu0
  %v451 = vadd.f32 %v255, %v450
  %v452 = vpop.f32.mrf.mxu0
  %453 = vmatprep.mubr.f32.mxu0 0.0
  %454 = vmatmul.mubr.f32.gmra.mxu0 %v315
  %v455 = vpop.f32.mrf.mxu0
  %v456 = vadd.f32 %v260, %v455
  %v457 = vpop.f32.mrf.mxu0
  %458 = vmatprep.mubr.f32.mxu0 0.0
  %459 = vmatmul.mubr.f32.gmra.mxu0 %v318
  %v460 = vpop.f32.mrf.mxu0
  %v461 = vadd.f32 %v265, %v460
  %v462 = vpop.f32.mrf.mxu0
  %463 = vmatprep.mubr.f32.mxu0 0.0
  %464 = vmatmul.mubr.f32.gmra.mxu0 %v321
  %v465 = vpop.f32.mrf.mxu0
  %v466 = vadd.f32 %v270, %v465
  %v467 = vpop.f32.mrf.mxu0
  %468 = vmatprep.mubr.f32.mxu0 0.0
  %469 = vmatmul.mubr.f32.gmra.mxu0 %v324
  %v470 = vpop.f32.mrf.mxu0
  %v471 = vadd.f32 %v275, %v470
  %v472 = vpop.f32.mrf.mxu0
  %473 = vdwg.mxu0
  %s474 = scalar_lea.vmem %s0, 2
  %v475 = vld [vmem:[%s474] ss:$2 sm:$0xff]
  %s476 = scalar_lea.vmem %s0, 50
  %v477 = vld [vmem:[%s476] ss:$2 sm:$0xff]
  %s478 = scalar_lea.vmem %s0, 98
  %v479 = vld [vmem:[%s478] ss:$2 sm:$0xff]
  %s480 = scalar_lea.vmem %s0, 146
  %v481 = vld [vmem:[%s480] ss:$2 sm:$0xff]
  %s482 = scalar_lea.vmem %s0, 194
  %v483 = vld [vmem:[%s482] ss:$2 sm:$0xff]
  %s484 = scalar_lea.vmem %s0, 242
  %v485 = vld [vmem:[%s484] ss:$2 sm:$0xff]
  %s486 = scalar_lea.vmem %s0, 290
  %v487 = vld [vmem:[%s486] ss:$2 sm:$0xff]
  %s488 = scalar_lea.vmem %s0, 338
  %v489 = vld [vmem:[%s488] ss:$2 sm:$0xff]
  %s490 = scalar_lea.vmem %s0, 434
  %v491 = vld [vmem:[%s490] ss:$2 sm:$0xff]
  %s492 = scalar_lea.vmem %s0, 482
  %v493 = vld [vmem:[%s492] ss:$2 sm:$0xff]
  %s494 = scalar_lea.vmem %s0, 530
  %v495 = vld [vmem:[%s494] ss:$2 sm:$0xff]
  %s496 = scalar_lea.vmem %s0, 578
  %v497 = vld [vmem:[%s496] ss:$2 sm:$0xff]
  %s498 = scalar_lea.vmem %s0, 626
  %v499 = vld [vmem:[%s498] ss:$2 sm:$0xff]
  %s500 = scalar_lea.vmem %s0, 674
  %v501 = vld [vmem:[%s500] ss:$2 sm:$0xff]
  %s502 = scalar_lea.vmem %s0, 722
  %v503 = vld [vmem:[%s502] ss:$2 sm:$0xff]
  %s504 = scalar_lea.vmem %s0, 770
  %v505 = vld [vmem:[%s504] ss:$2 sm:$0xff]
  %s506 = scalar_lea.vmem %s1, 8
  %v507 = vld [vmem:[%s506] sm:$0xf]
  %v509 = vsel %vm80, %v475, 0
  %v512 = vsel %vm80, %v477, 0
  %v515 = vsel %vm80, %v479, 0
  %v518 = vsel %vm80, %v481, 0
  %v521 = vsel %vm80, %v483, 0
  %v524 = vsel %vm80, %v485, 0
  %v527 = vsel %vm80, %v487, 0
  %v530 = vsel %vm80, %v489, 0
  %v533 = vsel %vm80, %v491, 0
  %v536 = vsel %vm80, %v493, 0
  %v539 = vsel %vm80, %v495, 0
  %v542 = vsel %vm80, %v497, 0
  %v545 = vsel %vm80, %v499, 0
  %v548 = vsel %vm80, %v501, 0
  %v551 = vsel %vm80, %v503, 0
  %v554 = vsel %vm80, %v505, 0
  %v557 = vsel %vm129, %v507, 0
  %559 = vmatprep.subr.mxu0 0.0
  %560 = vmatpush1.msra.mxu0 0.0
  %561 = vmatprep.subr.mxu0 0.0
  %562 = vmatpush1.msra.mxu0 0.0
  %563 = vmatprep.subr.mxu0 0.0
  %564 = vmatpush1.msra.mxu0 0.0
  %565 = vmatprep.subr.mxu0 0.0
  %566 = vmatpush1.msra.mxu0 0.0
  %567 = vmatprep.subr.mxu0 0.0
  %568 = vmatpush1.msra.mxu0 0.0
  %569 = vmatprep.subr.mxu0 0.0
  %570 = vmatpush1.msra.mxu0 0.0
  %571 = vmatprep.subr.mxu0 0.0
  %572 = vmatpush1.msra.mxu0 0.0
  %573 = vmatprep.subr.mxu0 0.0
  %574 = vmatpush1.msra.mxu0 0.0
  %575 = vmatprep.subr.mxu0 0.0
  %576 = vmatpush1.msra.mxu0 0.0
  %577 = vmatprep.subr.mxu0 0.0
  %578 = vmatpush1.msra.mxu0 0.0
  %579 = vmatprep.subr.mxu0 0.0
  %580 = vmatpush1.msra.mxu0 0.0
  %581 = vmatprep.subr.mxu0 0.0
  %582 = vmatpush1.msra.mxu0 0.0
  %583 = vmatprep.subr.mxu0 0.0
  %584 = vmatpush1.msra.mxu0 0.0
  %585 = vmatprep.subr.mxu0 0.0
  %586 = vmatpush1.msra.mxu0 0.0
  %587 = vmatprep.subr.mxu0 0.0
  %588 = vmatpush1.msra.mxu0 0.0
  %589 = vmatprep.subr.mxu0 0.0
  %590 = vmatpush1.msra.mxu0 %v557
  %591 = vmatprep.subr.mxu0 0.0
  %592 = vmatpush2.msra.mxu0 0.0
  %593 = vmatprep.subr.mxu0 0.0
  %594 = vmatpush2.msra.mxu0 0.0
  %595 = vmatprep.subr.mxu0 0.0
  %596 = vmatpush2.msra.mxu0 0.0
  %597 = vmatprep.subr.mxu0 0.0
  %598 = vmatpush2.msra.mxu0 0.0
  %599 = vmatprep.subr.mxu0 0.0
  %600 = vmatpush2.msra.mxu0 0.0
  %601 = vmatprep.subr.mxu0 0.0
  %602 = vmatpush2.msra.mxu0 0.0
  %603 = vmatprep.subr.mxu0 0.0
  %604 = vmatpush2.msra.mxu0 0.0
  %605 = vmatprep.subr.mxu0 0.0
  %606 = vmatpush2.msra.mxu0 0.0
  %607 = vmatprep.subr.mxu0 0.0
  %608 = vmatpush2.msra.mxu0 0.0
  %609 = vmatprep.subr.mxu0 0.0
  %610 = vmatpush2.msra.mxu0 0.0
  %611 = vmatprep.subr.mxu0 0.0
  %612 = vmatpush2.msra.mxu0 0.0
  %613 = vmatprep.subr.mxu0 0.0
  %614 = vmatpush2.msra.mxu0 0.0
  %615 = vmatprep.subr.mxu0 0.0
  %616 = vmatpush2.msra.mxu0 0.0
  %617 = vmatprep.subr.mxu0 0.0
  %618 = vmatpush2.msra.mxu0 0.0
  %619 = vmatprep.subr.mxu0 0.0
  %620 = vmatpush2.msra.mxu0 0.0
  %621 = vmatprep.subr.mxu0 0.0
  %622 = vmatpush2.msra.mxu0 0.0
  %623 = vmatprep.mubr.f32.mxu0 0.0
  %624 = vmatmul.mubr.f32.gmra.mxu0 %v509
  %v625 = vpop.f32.mrf.mxu0
  %v626 = vadd.f32 0.0, %v625
  %v627 = vpop.f32.mrf.mxu0
  %628 = vmatprep.mubr.f32.mxu0 0.0
  %629 = vmatmul.mubr.f32.gmra.mxu0 %v512
  %v630 = vpop.f32.mrf.mxu0
  %v631 = vadd.f32 0.0, %v630
  %v632 = vpop.f32.mrf.mxu0
  %633 = vmatprep.mubr.f32.mxu0 0.0
  %634 = vmatmul.mubr.f32.gmra.mxu0 %v515
  %v635 = vpop.f32.mrf.mxu0
  %v636 = vadd.f32 0.0, %v635
  %v637 = vpop.f32.mrf.mxu0
  %638 = vmatprep.mubr.f32.mxu0 0.0
  %639 = vmatmul.mubr.f32.gmra.mxu0 %v518
  %v640 = vpop.f32.mrf.mxu0
  %v641 = vadd.f32 0.0, %v640
  %v642 = vpop.f32.mrf.mxu0
  %643 = vmatprep.mubr.f32.mxu0 0.0
  %644 = vmatmul.mubr.f32.gmra.mxu0 %v521
  %v645 = vpop.f32.mrf.mxu0
  %v646 = vadd.f32 0.0, %v645
  %v647 = vpop.f32.mrf.mxu0
  %648 = vmatprep.mubr.f32.mxu0 0.0
  %649 = vmatmul.mubr.f32.gmra.mxu0 %v524
  %v650 = vpop.f32.mrf.mxu0
  %v651 = vadd.f32 0.0, %v650
  %v652 = vpop.f32.mrf.mxu0
  %653 = vmatprep.mubr.f32.mxu0 0.0
  %654 = vmatmul.mubr.f32.gmra.mxu0 %v527
  %v655 = vpop.f32.mrf.mxu0
  %v656 = vadd.f32 0.0, %v655
  %v657 = vpop.f32.mrf.mxu0
  %658 = vmatprep.mubr.f32.mxu0 0.0
  %659 = vmatmul.mubr.f32.gmra.mxu0 %v530
  %v660 = vpop.f32.mrf.mxu0
  %v661 = vadd.f32 0.0, %v660
  %v662 = vpop.f32.mrf.mxu0
  %663 = vmatprep.mubr.f32.mxu0 0.0
  %664 = vmatmul.mubr.f32.gmra.mxu0 %v533
  %v665 = vpop.f32.mrf.mxu0
  %v666 = vadd.f32 0.0, %v665
  %v667 = vpop.f32.mrf.mxu0
  %668 = vmatprep.mubr.f32.mxu0 0.0
  %669 = vmatmul.mubr.f32.gmra.mxu0 %v536
  %v670 = vpop.f32.mrf.mxu0
  %v671 = vadd.f32 0.0, %v670
  %v672 = vpop.f32.mrf.mxu0
  %673 = vmatprep.mubr.f32.mxu0 0.0
  %674 = vmatmul.mubr.f32.gmra.mxu0 %v539
  %v675 = vpop.f32.mrf.mxu0
  %v676 = vadd.f32 0.0, %v675
  %v677 = vpop.f32.mrf.mxu0
  %678 = vmatprep.mubr.f32.mxu0 0.0
  %679 = vmatmul.mubr.f32.gmra.mxu0 %v542
  %v680 = vpop.f32.mrf.mxu0
  %v681 = vadd.f32 0.0, %v680
  %v682 = vpop.f32.mrf.mxu0
  %683 = vmatprep.mubr.f32.mxu0 0.0
  %684 = vmatmul.mubr.f32.gmra.mxu0 %v545
  %v685 = vpop.f32.mrf.mxu0
  %v686 = vadd.f32 0.0, %v685
  %v687 = vpop.f32.mrf.mxu0
  %688 = vmatprep.mubr.f32.mxu0 0.0
  %689 = vmatmul.mubr.f32.gmra.mxu0 %v548
  %v690 = vpop.f32.mrf.mxu0
  %v691 = vadd.f32 0.0, %v690
  %v692 = vpop.f32.mrf.mxu0
  %693 = vmatprep.mubr.f32.mxu0 0.0
  %694 = vmatmul.mubr.f32.gmra.mxu0 %v551
  %v695 = vpop.f32.mrf.mxu0
  %v696 = vadd.f32 0.0, %v695
  %v697 = vpop.f32.mrf.mxu0
  %698 = vmatprep.mubr.f32.mxu0 0.0
  %699 = vmatmul.mubr.f32.gmra.mxu0 %v554
  %v700 = vpop.f32.mrf.mxu0
  %v701 = vadd.f32 0.0, %v700
  %v702 = vpop.f32.mrf.mxu0
  %703 = vdwg.mxu0
  %v704 = vadd.f32 %v396, %v626
  %v705 = vadd.f32 %v401, %v631
  %v706 = vadd.f32 %v406, %v636
  %v707 = vadd.f32 %v411, %v641
  %v708 = vadd.f32 %v416, %v646
  %v709 = vadd.f32 %v421, %v651
  %v710 = vadd.f32 %v426, %v656
  %v711 = vadd.f32 %v431, %v661
  %v712 = vadd.f32 %v436, %v666
  %v713 = vadd.f32 %v441, %v671
  %v714 = vadd.f32 %v446, %v676
  %v715 = vadd.f32 %v451, %v681
  %v716 = vadd.f32 %v456, %v686
  %v717 = vadd.f32 %v461, %v691
  %v718 = vadd.f32 %v466, %v696
  %v719 = vadd.f32 %v471, %v701
  %s720 = scalar_lea.vmem %s0, 24
  %v721 = vld [vmem:[%s720] ss:$2 sm:$0xff]
  %s722 = scalar_lea.vmem %s720, 48
  %v723 = vld [vmem:[%s722] ss:$2 sm:$0xff]
  %s724 = scalar_lea.vmem %s720, 96
  %v725 = vld [vmem:[%s724] ss:$2 sm:$0xff]
  %s726 = scalar_lea.vmem %s720, 144
  %v727 = vld [vmem:[%s726] ss:$2 sm:$0xff]
  %s728 = scalar_lea.vmem %s720, 192
  %v729 = vld [vmem:[%s728] ss:$2 sm:$0xff]
  %s730 = scalar_lea.vmem %s720, 240
  %v731 = vld [vmem:[%s730] ss:$2 sm:$0xff]
  %s732 = scalar_lea.vmem %s720, 288
  %v733 = vld [vmem:[%s732] ss:$2 sm:$0xff]
  %s734 = scalar_lea.vmem %s720, 336
  %v735 = vld [vmem:[%s734] ss:$2 sm:$0xff]
  %s736 = scalar_lea.vmem %s720, 432
  %v737 = vld [vmem:[%s736] ss:$2 sm:$0xff]
  %s738 = scalar_lea.vmem %s720, 480
  %v739 = vld [vmem:[%s738] ss:$2 sm:$0xff]
  %s740 = scalar_lea.vmem %s720, 528
  %v741 = vld [vmem:[%s740] ss:$2 sm:$0xff]
  %s742 = scalar_lea.vmem %s720, 576
  %v743 = vld [vmem:[%s742] ss:$2 sm:$0xff]
  %s744 = scalar_lea.vmem %s720, 624
  %v745 = vld [vmem:[%s744] ss:$2 sm:$0xff]
  %s746 = scalar_lea.vmem %s720, 672
  %v747 = vld [vmem:[%s746] ss:$2 sm:$0xff]
  %s748 = scalar_lea.vmem %s720, 720
  %v749 = vld [vmem:[%s748] ss:$2 sm:$0xff]
  %s750 = scalar_lea.vmem %s720, 768
  %v751 = vld [vmem:[%s750] ss:$2 sm:$0xff]
  %s752 = scalar_lea.vmem %s1, 12
  %v753 = vld [vmem:[%s752] sm:$0xf]
  %v755 = vsel %vm80, %v721, 0
  %v758 = vsel %vm80, %v723, 0
  %v761 = vsel %vm80, %v725, 0
  %v764 = vsel %vm80, %v727, 0
  %v767 = vsel %vm80, %v729, 0
  %v770 = vsel %vm80, %v731, 0
  %v773 = vsel %vm80, %v733, 0
  %v776 = vsel %vm80, %v735, 0
  %v779 = vsel %vm80, %v737, 0
  %v782 = vsel %vm80, %v739, 0
  %v785 = vsel %vm80, %v741, 0
  %v788 = vsel %vm80, %v743, 0
  %v791 = vsel %vm80, %v745, 0
  %v794 = vsel %vm80, %v747, 0
  %v797 = vsel %vm80, %v749, 0
  %v800 = vsel %vm80, %v751, 0
  %v803 = vsel %vm129, %v753, 0
  %805 = vmatprep.subr.mxu0 0.0
  %806 = vmatpush1.msra.mxu0 0.0
  %807 = vmatprep.subr.mxu0 0.0
  %808 = vmatpush1.msra.mxu0 0.0
  %809 = vmatprep.subr.mxu0 0.0
  %810 = vmatpush1.msra.mxu0 0.0
  %811 = vmatprep.subr.mxu0 0.0
  %812 = vmatpush1.msra.mxu0 0.0
  %813 = vmatprep.subr.mxu0 0.0
  %814 = vmatpush1.msra.mxu0 0.0
  %815 = vmatprep.subr.mxu0 0.0
  %816 = vmatpush1.msra.mxu0 0.0
  %817 = vmatprep.subr.mxu0 0.0
  %818 = vmatpush1.msra.mxu0 0.0
  %819 = vmatprep.subr.mxu0 0.0
  %820 = vmatpush1.msra.mxu0 0.0
  %821 = vmatprep.subr.mxu0 0.0
  %822 = vmatpush1.msra.mxu0 0.0
  %823 = vmatprep.subr.mxu0 0.0
  %824 = vmatpush1.msra.mxu0 0.0
  %825 = vmatprep.subr.mxu0 0.0
  %826 = vmatpush1.msra.mxu0 0.0
  %827 = vmatprep.subr.mxu0 0.0
  %828 = vmatpush1.msra.mxu0 0.0
  %829 = vmatprep.subr.mxu0 0.0
  %830 = vmatpush1.msra.mxu0 0.0
  %831 = vmatprep.subr.mxu0 0.0
  %832 = vmatpush1.msra.mxu0 0.0
  %833 = vmatprep.subr.mxu0 0.0
  %834 = vmatpush1.msra.mxu0 0.0
  %835 = vmatprep.subr.mxu0 0.0
  %836 = vmatpush1.msra.mxu0 %v803
  %837 = vmatprep.subr.mxu0 0.0
  %838 = vmatpush2.msra.mxu0 0.0
  %839 = vmatprep.subr.mxu0 0.0
  %840 = vmatpush2.msra.mxu0 0.0
  %841 = vmatprep.subr.mxu0 0.0
  %842 = vmatpush2.msra.mxu0 0.0
  %843 = vmatprep.subr.mxu0 0.0
  %844 = vmatpush2.msra.mxu0 0.0
  %845 = vmatprep.subr.mxu0 0.0
  %846 = vmatpush2.msra.mxu0 0.0
  %847 = vmatprep.subr.mxu0 0.0
  %848 = vmatpush2.msra.mxu0 0.0
  %849 = vmatprep.subr.mxu0 0.0
  %850 = vmatpush2.msra.mxu0 0.0
  %851 = vmatprep.subr.mxu0 0.0
  %852 = vmatpush2.msra.mxu0 0.0
  %853 = vmatprep.subr.mxu0 0.0
  %854 = vmatpush2.msra.mxu0 0.0
  %855 = vmatprep.subr.mxu0 0.0
  %856 = vmatpush2.msra.mxu0 0.0
  %857 = vmatprep.subr.mxu0 0.0
  %858 = vmatpush2.msra.mxu0 0.0
  %859 = vmatprep.subr.mxu0 0.0
  %860 = vmatpush2.msra.mxu0 0.0
  %861 = vmatprep.subr.mxu0 0.0
  %862 = vmatpush2.msra.mxu0 0.0
  %863 = vmatprep.subr.mxu0 0.0
  %864 = vmatpush2.msra.mxu0 0.0
  %865 = vmatprep.subr.mxu0 0.0
  %866 = vmatpush2.msra.mxu0 0.0
  %867 = vmatprep.subr.mxu0 0.0
  %868 = vmatpush2.msra.mxu0 0.0
  %869 = vmatprep.mubr.f32.mxu0 0.0
  %870 = vmatmul.mubr.f32.gmra.mxu0 %v755
  %v871 = vpop.f32.mrf.mxu0
  %v872 = vadd.f32 0.0, %v871
  %v873 = vpop.f32.mrf.mxu0
  %874 = vmatprep.mubr.f32.mxu0 0.0
  %875 = vmatmul.mubr.f32.gmra.mxu0 %v758
  %v876 = vpop.f32.mrf.mxu0
  %v877 = vadd.f32 0.0, %v876
  %v878 = vpop.f32.mrf.mxu0
  %879 = vmatprep.mubr.f32.mxu0 0.0
  %880 = vmatmul.mubr.f32.gmra.mxu0 %v761
  %v881 = vpop.f32.mrf.mxu0
  %v882 = vadd.f32 0.0, %v881
  %v883 = vpop.f32.mrf.mxu0
  %884 = vmatprep.mubr.f32.mxu0 0.0
  %885 = vmatmul.mubr.f32.gmra.mxu0 %v764
  %v886 = vpop.f32.mrf.mxu0
  %v887 = vadd.f32 0.0, %v886
  %v888 = vpop.f32.mrf.mxu0
  %889 = vmatprep.mubr.f32.mxu0 0.0
  %890 = vmatmul.mubr.f32.gmra.mxu0 %v767
  %v891 = vpop.f32.mrf.mxu0
  %v892 = vadd.f32 0.0, %v891
  %v893 = vpop.f32.mrf.mxu0
  %894 = vmatprep.mubr.f32.mxu0 0.0
  %895 = vmatmul.mubr.f32.gmra.mxu0 %v770
  %v896 = vpop.f32.mrf.mxu0
  %v897 = vadd.f32 0.0, %v896
  %v898 = vpop.f32.mrf.mxu0
  %899 = vmatprep.mubr.f32.mxu0 0.0
  %900 = vmatmul.mubr.f32.gmra.mxu0 %v773
  %v901 = vpop.f32.mrf.mxu0
  %v902 = vadd.f32 0.0, %v901
  %v903 = vpop.f32.mrf.mxu0
  %904 = vmatprep.mubr.f32.mxu0 0.0
  %905 = vmatmul.mubr.f32.gmra.mxu0 %v776
  %v906 = vpop.f32.mrf.mxu0
  %v907 = vadd.f32 0.0, %v906
  %v908 = vpop.f32.mrf.mxu0
  %909 = vmatprep.mubr.f32.mxu0 0.0
  %910 = vmatmul.mubr.f32.gmra.mxu0 %v779
  %v911 = vpop.f32.mrf.mxu0
  %v912 = vadd.f32 0.0, %v911
  %v913 = vpop.f32.mrf.mxu0
  %914 = vmatprep.mubr.f32.mxu0 0.0
  %915 = vmatmul.mubr.f32.gmra.mxu0 %v782
  %v916 = vpop.f32.mrf.mxu0
  %v917 = vadd.f32 0.0, %v916
  %v918 = vpop.f32.mrf.mxu0
  %919 = vmatprep.mubr.f32.mxu0 0.0
  %920 = vmatmul.mubr.f32.gmra.mxu0 %v785
  %v921 = vpop.f32.mrf.mxu0
  %v922 = vadd.f32 0.0, %v921
  %v923 = vpop.f32.mrf.mxu0
  %924 = vmatprep.mubr.f32.mxu0 0.0
  %925 = vmatmul.mubr.f32.gmra.mxu0 %v788
  %v926 = vpop.f32.mrf.mxu0
  %v927 = vadd.f32 0.0, %v926
  %v928 = vpop.f32.mrf.mxu0
  %929 = vmatprep.mubr.f32.mxu0 0.0
  %930 = vmatmul.mubr.f32.gmra.mxu0 %v791
  %v931 = vpop.f32.mrf.mxu0
  %v932 = vadd.f32 0.0, %v931
  %v933 = vpop.f32.mrf.mxu0
  %934 = vmatprep.mubr.f32.mxu0 0.0
  %935 = vmatmul.mubr.f32.gmra.mxu0 %v794
  %v936 = vpop.f32.mrf.mxu0
  %v937 = vadd.f32 0.0, %v936
  %v938 = vpop.f32.mrf.mxu0
  %939 = vmatprep.mubr.f32.mxu0 0.0
  %940 = vmatmul.mubr.f32.gmra.mxu0 %v797
  %v941 = vpop.f32.mrf.mxu0
  %v942 = vadd.f32 0.0, %v941
  %v943 = vpop.f32.mrf.mxu0
  %944 = vmatprep.mubr.f32.mxu0 0.0
  %945 = vmatmul.mubr.f32.gmra.mxu0 %v800
  %v946 = vpop.f32.mrf.mxu0
  %v947 = vadd.f32 0.0, %v946
  %v948 = vpop.f32.mrf.mxu0
  %949 = vdwg.mxu0
  %v950 = vadd.f32 %v704, %v872
  %v951 = vadd.f32 %v705, %v877
  %v952 = vadd.f32 %v706, %v882
  %v953 = vadd.f32 %v707, %v887
  %v954 = vadd.f32 %v708, %v892
  %v955 = vadd.f32 %v709, %v897
  %v956 = vadd.f32 %v710, %v902
  %v957 = vadd.f32 %v711, %v907
  %v958 = vadd.f32 %v712, %v912
  %v959 = vadd.f32 %v713, %v917
  %v960 = vadd.f32 %v714, %v922
  %v961 = vadd.f32 %v715, %v927
  %v962 = vadd.f32 %v716, %v932
  %v963 = vadd.f32 %v717, %v937
  %v964 = vadd.f32 %v718, %v942
  %v965 = vadd.f32 %v719, %v947
  %s966 = scalar_lea.vmem %s720, 1
  %v967 = vld [vmem:[%s966] ss:$2 sm:$0xff]
  %s968 = scalar_lea.vmem %s720, 49
  %v969 = vld [vmem:[%s968] ss:$2 sm:$0xff]
  %s970 = scalar_lea.vmem %s720, 97
  %v971 = vld [vmem:[%s970] ss:$2 sm:$0xff]
  %s972 = scalar_lea.vmem %s720, 145
  %v973 = vld [vmem:[%s972] ss:$2 sm:$0xff]
  %s974 = scalar_lea.vmem %s720, 193
  %v975 = vld [vmem:[%s974] ss:$2 sm:$0xff]
  %s976 = scalar_lea.vmem %s720, 241
  %v977 = vld [vmem:[%s976] ss:$2 sm:$0xff]
  %s978 = scalar_lea.vmem %s720, 289
  %v979 = vld [vmem:[%s978] ss:$2 sm:$0xff]
  %s980 = scalar_lea.vmem %s720, 337
  %v981 = vld [vmem:[%s980] ss:$2 sm:$0xff]
  %s982 = scalar_lea.vmem %s720, 433
  %v983 = vld [vmem:[%s982] ss:$2 sm:$0xff]
  %s984 = scalar_lea.vmem %s720, 481
  %v985 = vld [vmem:[%s984] ss:$2 sm:$0xff]
  %s986 = scalar_lea.vmem %s720, 529
  %v987 = vld [vmem:[%s986] ss:$2 sm:$0xff]
  %s988 = scalar_lea.vmem %s720, 577
  %v989 = vld [vmem:[%s988] ss:$2 sm:$0xff]
  %s990 = scalar_lea.vmem %s720, 625
  %v991 = vld [vmem:[%s990] ss:$2 sm:$0xff]
  %s992 = scalar_lea.vmem %s720, 673
  %v993 = vld [vmem:[%s992] ss:$2 sm:$0xff]
  %s994 = scalar_lea.vmem %s720, 721
  %v995 = vld [vmem:[%s994] ss:$2 sm:$0xff]
  %s996 = scalar_lea.vmem %s720, 769
  %v997 = vld [vmem:[%s996] ss:$2 sm:$0xff]
  %s998 = scalar_lea.vmem %s1, 16
  %v999 = vld [vmem:[%s998] sm:$0xf]
  %v1001 = vsel %vm80, %v967, 0
  %v1004 = vsel %vm80, %v969, 0
  %v1007 = vsel %vm80, %v971, 0
  %v1010 = vsel %vm80, %v973, 0
  %v1013 = vsel %vm80, %v975, 0
  %v1016 = vsel %vm80, %v977, 0
  %v1019 = vsel %vm80, %v979, 0
  %v1022 = vsel %vm80, %v981, 0
  %v1025 = vsel %vm80, %v983, 0
  %v1028 = vsel %vm80, %v985, 0
  %v1031 = vsel %vm80, %v987, 0
  %v1034 = vsel %vm80, %v989, 0
  %v1037 = vsel %vm80, %v991, 0
  %v1040 = vsel %vm80, %v993, 0
  %v1043 = vsel %vm80, %v995, 0
  %v1046 = vsel %vm80, %v997, 0
  %v1049 = vsel %vm129, %v999, 0
  %1051 = vmatprep.subr.mxu0 0.0
  %1052 = vmatpush1.msra.mxu0 0.0
  %1053 = vmatprep.subr.mxu0 0.0
  %1054 = vmatpush1.msra.mxu0 0.0
  %1055 = vmatprep.subr.mxu0 0.0
  %1056 = vmatpush1.msra.mxu0 0.0
  %1057 = vmatprep.subr.mxu0 0.0
  %1058 = vmatpush1.msra.mxu0 0.0
  %1059 = vmatprep.subr.mxu0 0.0
  %1060 = vmatpush1.msra.mxu0 0.0
  %1061 = vmatprep.subr.mxu0 0.0
  %1062 = vmatpush1.msra.mxu0 0.0
  %1063 = vmatprep.subr.mxu0 0.0
  %1064 = vmatpush1.msra.mxu0 0.0
  %1065 = vmatprep.subr.mxu0 0.0
  %1066 = vmatpush1.msra.mxu0 0.0
  %1067 = vmatprep.subr.mxu0 0.0
  %1068 = vmatpush1.msra.mxu0 0.0
  %1069 = vmatprep.subr.mxu0 0.0
  %1070 = vmatpush1.msra.mxu0 0.0
  %1071 = vmatprep.subr.mxu0 0.0
  %1072 = vmatpush1.msra.mxu0 0.0
  %1073 = vmatprep.subr.mxu0 0.0
  %1074 = vmatpush1.msra.mxu0 0.0
  %1075 = vmatprep.subr.mxu0 0.0
  %1076 = vmatpush1.msra.mxu0 0.0
  %1077 = vmatprep.subr.mxu0 0.0
  %1078 = vmatpush1.msra.mxu0 0.0
  %1079 = vmatprep.subr.mxu0 0.0
  %1080 = vmatpush1.msra.mxu0 0.0
  %1081 = vmatprep.subr.mxu0 0.0
  %1082 = vmatpush1.msra.mxu0 %v1049
  %1083 = vmatprep.subr.mxu0 0.0
  %1084 = vmatpush2.msra.mxu0 0.0
  %1085 = vmatprep.subr.mxu0 0.0
  %1086 = vmatpush2.msra.mxu0 0.0
  %1087 = vmatprep.subr.mxu0 0.0
  %1088 = vmatpush2.msra.mxu0 0.0
  %1089 = vmatprep.subr.mxu0 0.0
  %1090 = vmatpush2.msra.mxu0 0.0
  %1091 = vmatprep.subr.mxu0 0.0
  %1092 = vmatpush2.msra.mxu0 0.0
  %1093 = vmatprep.subr.mxu0 0.0
  %1094 = vmatpush2.msra.mxu0 0.0
  %1095 = vmatprep.subr.mxu0 0.0
  %1096 = vmatpush2.msra.mxu0 0.0
  %1097 = vmatprep.subr.mxu0 0.0
  %1098 = vmatpush2.msra.mxu0 0.0
  %1099 = vmatprep.subr.mxu0 0.0
  %1100 = vmatpush2.msra.mxu0 0.0
  %1101 = vmatprep.subr.mxu0 0.0
  %1102 = vmatpush2.msra.mxu0 0.0
  %1103 = vmatprep.subr.mxu0 0.0
  %1104 = vmatpush2.msra.mxu0 0.0
  %1105 = vmatprep.subr.mxu0 0.0
  %1106 = vmatpush2.msra.mxu0 0.0
  %1107 = vmatprep.subr.mxu0 0.0
  %1108 = vmatpush2.msra.mxu0 0.0
  %1109 = vmatprep.subr.mxu0 0.0
  %1110 = vmatpush2.msra.mxu0 0.0
  %1111 = vmatprep.subr.mxu0 0.0
  %1112 = vmatpush2.msra.mxu0 0.0
  %1113 = vmatprep.subr.mxu0 0.0
  %1114 = vmatpush2.msra.mxu0 0.0
  %1115 = vmatprep.mubr.f32.mxu0 0.0
  %1116 = vmatmul.mubr.f32.gmra.mxu0 %v1001
  %v1117 = vpop.f32.mrf.mxu0
  %v1118 = vadd.f32 0.0, %v1117
  %v1119 = vpop.f32.mrf.mxu0
  %1120 = vmatprep.mubr.f32.mxu0 0.0
  %1121 = vmatmul.mubr.f32.gmra.mxu0 %v1004
  %v1122 = vpop.f32.mrf.mxu0
  %v1123 = vadd.f32 0.0, %v1122
  %v1124 = vpop.f32.mrf.mxu0
  %1125 = vmatprep.mubr.f32.mxu0 0.0
  %1126 = vmatmul.mubr.f32.gmra.mxu0 %v1007
  %v1127 = vpop.f32.mrf.mxu0
  %v1128 = vadd.f32 0.0, %v1127
  %v1129 = vpop.f32.mrf.mxu0
  %1130 = vmatprep.mubr.f32.mxu0 0.0
  %1131 = vmatmul.mubr.f32.gmra.mxu0 %v1010
  %v1132 = vpop.f32.mrf.mxu0
  %v1133 = vadd.f32 0.0, %v1132
  %v1134 = vpop.f32.mrf.mxu0
  %1135 = vmatprep.mubr.f32.mxu0 0.0
  %1136 = vmatmul.mubr.f32.gmra.mxu0 %v1013
  %v1137 = vpop.f32.mrf.mxu0
  %v1138 = vadd.f32 0.0, %v1137
  %v1139 = vpop.f32.mrf.mxu0
  %1140 = vmatprep.mubr.f32.mxu0 0.0
  %1141 = vmatmul.mubr.f32.gmra.mxu0 %v1016
  %v1142 = vpop.f32.mrf.mxu0
  %v1143 = vadd.f32 0.0, %v1142
  %v1144 = vpop.f32.mrf.mxu0
  %1145 = vmatprep.mubr.f32.mxu0 0.0
  %1146 = vmatmul.mubr.f32.gmra.mxu0 %v1019
  %v1147 = vpop.f32.mrf.mxu0
  %v1148 = vadd.f32 0.0, %v1147
  %v1149 = vpop.f32.mrf.mxu0
  %1150 = vmatprep.mubr.f32.mxu0 0.0
  %1151 = vmatmul.mubr.f32.gmra.mxu0 %v1022
  %v1152 = vpop.f32.mrf.mxu0
  %v1153 = vadd.f32 0.0, %v1152
  %v1154 = vpop.f32.mrf.mxu0
  %1155 = vmatprep.mubr.f32.mxu0 0.0
  %1156 = vmatmul.mubr.f32.gmra.mxu0 %v1025
  %v1157 = vpop.f32.mrf.mxu0
  %v1158 = vadd.f32 0.0, %v1157
  %v1159 = vpop.f32.mrf.mxu0
  %1160 = vmatprep.mubr.f32.mxu0 0.0
  %1161 = vmatmul.mubr.f32.gmra.mxu0 %v1028
  %v1162 = vpop.f32.mrf.mxu0
  %v1163 = vadd.f32 0.0, %v1162
  %v1164 = vpop.f32.mrf.mxu0
  %1165 = vmatprep.mubr.f32.mxu0 0.0
  %1166 = vmatmul.mubr.f32.gmra.mxu0 %v1031
  %v1167 = vpop.f32.mrf.mxu0
  %v1168 = vadd.f32 0.0, %v1167
  %v1169 = vpop.f32.mrf.mxu0
  %1170 = vmatprep.mubr.f32.mxu0 0.0
  %1171 = vmatmul.mubr.f32.gmra.mxu0 %v1034
  %v1172 = vpop.f32.mrf.mxu0
  %v1173 = vadd.f32 0.0, %v1172
  %v1174 = vpop.f32.mrf.mxu0
  %1175 = vmatprep.mubr.f32.mxu0 0.0
  %1176 = vmatmul.mubr.f32.gmra.mxu0 %v1037
  %v1177 = vpop.f32.mrf.mxu0
  %v1178 = vadd.f32 0.0, %v1177
  %v1179 = vpop.f32.mrf.mxu0
  %1180 = vmatprep.mubr.f32.mxu0 0.0
  %1181 = vmatmul.mubr.f32.gmra.mxu0 %v1040
  %v1182 = vpop.f32.mrf.mxu0
  %v1183 = vadd.f32 0.0, %v1182
  %v1184 = vpop.f32.mrf.mxu0
  %1185 = vmatprep.mubr.f32.mxu0 0.0
  %1186 = vmatmul.mubr.f32.gmra.mxu0 %v1043
  %v1187 = vpop.f32.mrf.mxu0
  %v1188 = vadd.f32 0.0, %v1187
  %v1189 = vpop.f32.mrf.mxu0
  %1190 = vmatprep.mubr.f32.mxu0 0.0
  %1191 = vmatmul.mubr.f32.gmra.mxu0 %v1046
  %v1192 = vpop.f32.mrf.mxu0
  %v1193 = vadd.f32 0.0, %v1192
  %v1194 = vpop.f32.mrf.mxu0
  %1195 = vdwg.mxu0
  %v1196 = vadd.f32 %v950, %v1118
  %v1197 = vadd.f32 %v951, %v1123
  %v1198 = vadd.f32 %v952, %v1128
  %v1199 = vadd.f32 %v953, %v1133
  %v1200 = vadd.f32 %v954, %v1138
  %v1201 = vadd.f32 %v955, %v1143
  %v1202 = vadd.f32 %v956, %v1148
  %v1203 = vadd.f32 %v957, %v1153
  %v1204 = vadd.f32 %v958, %v1158
  %v1205 = vadd.f32 %v959, %v1163
  %v1206 = vadd.f32 %v960, %v1168
  %v1207 = vadd.f32 %v961, %v1173
  %v1208 = vadd.f32 %v962, %v1178
  %v1209 = vadd.f32 %v963, %v1183
  %v1210 = vadd.f32 %v964, %v1188
  %v1211 = vadd.f32 %v965, %v1193
  %s1212 = scalar_lea.vmem %s720, 2
  %v1213 = vld [vmem:[%s1212] ss:$2 sm:$0xff]
  %s1214 = scalar_lea.vmem %s720, 50
  %v1215 = vld [vmem:[%s1214] ss:$2 sm:$0xff]
  %s1216 = scalar_lea.vmem %s720, 98
  %v1217 = vld [vmem:[%s1216] ss:$2 sm:$0xff]
  %s1218 = scalar_lea.vmem %s720, 146
  %v1219 = vld [vmem:[%s1218] ss:$2 sm:$0xff]
  %s1220 = scalar_lea.vmem %s720, 194
  %v1221 = vld [vmem:[%s1220] ss:$2 sm:$0xff]
  %s1222 = scalar_lea.vmem %s720, 242
  %v1223 = vld [vmem:[%s1222] ss:$2 sm:$0xff]
  %s1224 = scalar_lea.vmem %s720, 290
  %v1225 = vld [vmem:[%s1224] ss:$2 sm:$0xff]
  %s1226 = scalar_lea.vmem %s720, 338
  %v1227 = vld [vmem:[%s1226] ss:$2 sm:$0xff]
  %s1228 = scalar_lea.vmem %s720, 434
  %v1229 = vld [vmem:[%s1228] ss:$2 sm:$0xff]
  %s1230 = scalar_lea.vmem %s720, 482
  %v1231 = vld [vmem:[%s1230] ss:$2 sm:$0xff]
  %s1232 = scalar_lea.vmem %s720, 530
  %v1233 = vld [vmem:[%s1232] ss:$2 sm:$0xff]
  %s1234 = scalar_lea.vmem %s720, 578
  %v1235 = vld [vmem:[%s1234] ss:$2 sm:$0xff]
  %s1236 = scalar_lea.vmem %s720, 626
  %v1237 = vld [vmem:[%s1236] ss:$2 sm:$0xff]
  %s1238 = scalar_lea.vmem %s720, 674
  %v1239 = vld [vmem:[%s1238] ss:$2 sm:$0xff]
  %s1240 = scalar_lea.vmem %s720, 722
  %v1241 = vld [vmem:[%s1240] ss:$2 sm:$0xff]
  %s1242 = scalar_lea.vmem %s720, 770
  %v1243 = vld [vmem:[%s1242] ss:$2 sm:$0xff]
  %s1244 = scalar_lea.vmem %s1, 20
  %v1245 = vld [vmem:[%s1244] sm:$0xf]
  %v1247 = vsel %vm80, %v1213, 0
  %v1250 = vsel %vm80, %v1215, 0
  %v1253 = vsel %vm80, %v1217, 0
  %v1256 = vsel %vm80, %v1219, 0
  %v1259 = vsel %vm80, %v1221, 0
  %v1262 = vsel %vm80, %v1223, 0
  %v1265 = vsel %vm80, %v1225, 0
  %v1268 = vsel %vm80, %v1227, 0
  %v1271 = vsel %vm80, %v1229, 0
  %v1274 = vsel %vm80, %v1231, 0
  %v1277 = vsel %vm80, %v1233, 0
  %v1280 = vsel %vm80, %v1235, 0
  %v1283 = vsel %vm80, %v1237, 0
  %v1286 = vsel %vm80, %v1239, 0
  %v1289 = vsel %vm80, %v1241, 0
  %v1292 = vsel %vm80, %v1243, 0
  %v1295 = vsel %vm129, %v1245, 0
  %1297 = vmatprep.subr.mxu0 0.0
  %1298 = vmatpush1.msra.mxu0 0.0
  %1299 = vmatprep.subr.mxu0 0.0
  %1300 = vmatpush1.msra.mxu0 0.0
  %1301 = vmatprep.subr.mxu0 0.0
  %1302 = vmatpush1.msra.mxu0 0.0
  %1303 = vmatprep.subr.mxu0 0.0
  %1304 = vmatpush1.msra.mxu0 0.0
  %1305 = vmatprep.subr.mxu0 0.0
  %1306 = vmatpush1.msra.mxu0 0.0
  %1307 = vmatprep.subr.mxu0 0.0
  %1308 = vmatpush1.msra.mxu0 0.0
  %1309 = vmatprep.subr.mxu0 0.0
  %1310 = vmatpush1.msra.mxu0 0.0
  %1311 = vmatprep.subr.mxu0 0.0
  %1312 = vmatpush1.msra.mxu0 0.0
  %1313 = vmatprep.subr.mxu0 0.0
  %1314 = vmatpush1.msra.mxu0 0.0
  %1315 = vmatprep.subr.mxu0 0.0
  %1316 = vmatpush1.msra.mxu0 0.0
  %1317 = vmatprep.subr.mxu0 0.0
  %1318 = vmatpush1.msra.mxu0 0.0
  %1319 = vmatprep.subr.mxu0 0.0
  %1320 = vmatpush1.msra.mxu0 0.0
  %1321 = vmatprep.subr.mxu0 0.0
  %1322 = vmatpush1.msra.mxu0 0.0
  %1323 = vmatprep.subr.mxu0 0.0
  %1324 = vmatpush1.msra.mxu0 0.0
  %1325 = vmatprep.subr.mxu0 0.0
  %1326 = vmatpush1.msra.mxu0 0.0
  %1327 = vmatprep.subr.mxu0 0.0
  %1328 = vmatpush1.msra.mxu0 %v1295
  %1329 = vmatprep.subr.mxu0 0.0
  %1330 = vmatpush2.msra.mxu0 0.0
  %1331 = vmatprep.subr.mxu0 0.0
  %1332 = vmatpush2.msra.mxu0 0.0
  %1333 = vmatprep.subr.mxu0 0.0
  %1334 = vmatpush2.msra.mxu0 0.0
  %1335 = vmatprep.subr.mxu0 0.0
  %1336 = vmatpush2.msra.mxu0 0.0
  %1337 = vmatprep.subr.mxu0 0.0
  %1338 = vmatpush2.msra.mxu0 0.0
  %1339 = vmatprep.subr.mxu0 0.0
  %1340 = vmatpush2.msra.mxu0 0.0
  %1341 = vmatprep.subr.mxu0 0.0
  %1342 = vmatpush2.msra.mxu0 0.0
  %1343 = vmatprep.subr.mxu0 0.0
  %1344 = vmatpush2.msra.mxu0 0.0
  %1345 = vmatprep.subr.mxu0 0.0
  %1346 = vmatpush2.msra.mxu0 0.0
  %1347 = vmatprep.subr.mxu0 0.0
  %1348 = vmatpush2.msra.mxu0 0.0
  %1349 = vmatprep.subr.mxu0 0.0
  %1350 = vmatpush2.msra.mxu0 0.0
  %1351 = vmatprep.subr.mxu0 0.0
  %1352 = vmatpush2.msra.mxu0 0.0
  %1353 = vmatprep.subr.mxu0 0.0
  %1354 = vmatpush2.msra.mxu0 0.0
  %1355 = vmatprep.subr.mxu0 0.0
  %1356 = vmatpush2.msra.mxu0 0.0
  %1357 = vmatprep.subr.mxu0 0.0
  %1358 = vmatpush2.msra.mxu0 0.0
  %1359 = vmatprep.subr.mxu0 0.0
  %1360 = vmatpush2.msra.mxu0 0.0
  %1361 = vmatprep.mubr.f32.mxu0 0.0
  %1362 = vmatmul.mubr.f32.gmra.mxu0 %v1247
  %v1363 = vpop.f32.mrf.mxu0
  %v1364 = vadd.f32 0.0, %v1363
  %v1365 = vpop.f32.mrf.mxu0
  %1366 = vmatprep.mubr.f32.mxu0 0.0
  %1367 = vmatmul.mubr.f32.gmra.mxu0 %v1250
  %v1368 = vpop.f32.mrf.mxu0
  %v1369 = vadd.f32 0.0, %v1368
  %v1370 = vpop.f32.mrf.mxu0
  %1371 = vmatprep.mubr.f32.mxu0 0.0
  %1372 = vmatmul.mubr.f32.gmra.mxu0 %v1253
  %v1373 = vpop.f32.mrf.mxu0
  %v1374 = vadd.f32 0.0, %v1373
  %v1375 = vpop.f32.mrf.mxu0
  %1376 = vmatprep.mubr.f32.mxu0 0.0
  %1377 = vmatmul.mubr.f32.gmra.mxu0 %v1256
  %v1378 = vpop.f32.mrf.mxu0
  %v1379 = vadd.f32 0.0, %v1378
  %v1380 = vpop.f32.mrf.mxu0
  %1381 = vmatprep.mubr.f32.mxu0 0.0
  %1382 = vmatmul.mubr.f32.gmra.mxu0 %v1259
  %v1383 = vpop.f32.mrf.mxu0
  %v1384 = vadd.f32 0.0, %v1383
  %v1385 = vpop.f32.mrf.mxu0
  %1386 = vmatprep.mubr.f32.mxu0 0.0
  %1387 = vmatmul.mubr.f32.gmra.mxu0 %v1262
  %v1388 = vpop.f32.mrf.mxu0
  %v1389 = vadd.f32 0.0, %v1388
  %v1390 = vpop.f32.mrf.mxu0
  %1391 = vmatprep.mubr.f32.mxu0 0.0
  %1392 = vmatmul.mubr.f32.gmra.mxu0 %v1265
  %v1393 = vpop.f32.mrf.mxu0
  %v1394 = vadd.f32 0.0, %v1393
  %v1395 = vpop.f32.mrf.mxu0
  %1396 = vmatprep.mubr.f32.mxu0 0.0
  %1397 = vmatmul.mubr.f32.gmra.mxu0 %v1268
  %v1398 = vpop.f32.mrf.mxu0
  %v1399 = vadd.f32 0.0, %v1398
  %v1400 = vpop.f32.mrf.mxu0
  %1401 = vmatprep.mubr.f32.mxu0 0.0
  %1402 = vmatmul.mubr.f32.gmra.mxu0 %v1271
  %v1403 = vpop.f32.mrf.mxu0
  %v1404 = vadd.f32 0.0, %v1403
  %v1405 = vpop.f32.mrf.mxu0
  %1406 = vmatprep.mubr.f32.mxu0 0.0
  %1407 = vmatmul.mubr.f32.gmra.mxu0 %v1274
  %v1408 = vpop.f32.mrf.mxu0
  %v1409 = vadd.f32 0.0, %v1408
  %v1410 = vpop.f32.mrf.mxu0
  %1411 = vmatprep.mubr.f32.mxu0 0.0
  %1412 = vmatmul.mubr.f32.gmra.mxu0 %v1277
  %v1413 = vpop.f32.mrf.mxu0
  %v1414 = vadd.f32 0.0, %v1413
  %v1415 = vpop.f32.mrf.mxu0
  %1416 = vmatprep.mubr.f32.mxu0 0.0
  %1417 = vmatmul.mubr.f32.gmra.mxu0 %v1280
  %v1418 = vpop.f32.mrf.mxu0
  %v1419 = vadd.f32 0.0, %v1418
  %v1420 = vpop.f32.mrf.mxu0
  %1421 = vmatprep.mubr.f32.mxu0 0.0
  %1422 = vmatmul.mubr.f32.gmra.mxu0 %v1283
  %v1423 = vpop.f32.mrf.mxu0
  %v1424 = vadd.f32 0.0, %v1423
  %v1425 = vpop.f32.mrf.mxu0
  %1426 = vmatprep.mubr.f32.mxu0 0.0
  %1427 = vmatmul.mubr.f32.gmra.mxu0 %v1286
  %v1428 = vpop.f32.mrf.mxu0
  %v1429 = vadd.f32 0.0, %v1428
  %v1430 = vpop.f32.mrf.mxu0
  %1431 = vmatprep.mubr.f32.mxu0 0.0
  %1432 = vmatmul.mubr.f32.gmra.mxu0 %v1289
  %v1433 = vpop.f32.mrf.mxu0
  %v1434 = vadd.f32 0.0, %v1433
  %v1435 = vpop.f32.mrf.mxu0
  %1436 = vmatprep.mubr.f32.mxu0 0.0
  %1437 = vmatmul.mubr.f32.gmra.mxu0 %v1292
  %v1438 = vpop.f32.mrf.mxu0
  %v1439 = vadd.f32 0.0, %v1438
  %v1440 = vpop.f32.mrf.mxu0
  %1441 = vdwg.mxu0
  %v1442 = vadd.f32 %v1196, %v1364
  %v1443 = vadd.f32 %v1197, %v1369
  %v1444 = vadd.f32 %v1198, %v1374
  %v1445 = vadd.f32 %v1199, %v1379
  %v1446 = vadd.f32 %v1200, %v1384
  %v1447 = vadd.f32 %v1201, %v1389
  %v1448 = vadd.f32 %v1202, %v1394
  %v1449 = vadd.f32 %v1203, %v1399
  %v1450 = vadd.f32 %v1204, %v1404
  %v1451 = vadd.f32 %v1205, %v1409
  %v1452 = vadd.f32 %v1206, %v1414
  %v1453 = vadd.f32 %v1207, %v1419
  %v1454 = vadd.f32 %v1208, %v1424
  %v1455 = vadd.f32 %v1209, %v1429
  %v1456 = vadd.f32 %v1210, %v1434
  %v1457 = vadd.f32 %v1211, %v1439
  %s1458 = scalar_lea.vmem %s0, 48
  %v1459 = vld [vmem:[%s1458] ss:$2 sm:$0xff]
  %s1460 = scalar_lea.vmem %s1458, 48
  %v1461 = vld [vmem:[%s1460] ss:$2 sm:$0xff]
  %s1462 = scalar_lea.vmem %s1458, 96
  %v1463 = vld [vmem:[%s1462] ss:$2 sm:$0xff]
  %s1464 = scalar_lea.vmem %s1458, 144
  %v1465 = vld [vmem:[%s1464] ss:$2 sm:$0xff]
  %s1466 = scalar_lea.vmem %s1458, 192
  %v1467 = vld [vmem:[%s1466] ss:$2 sm:$0xff]
  %s1468 = scalar_lea.vmem %s1458, 240
  %v1469 = vld [vmem:[%s1468] ss:$2 sm:$0xff]
  %s1470 = scalar_lea.vmem %s1458, 288
  %v1471 = vld [vmem:[%s1470] ss:$2 sm:$0xff]
  %s1472 = scalar_lea.vmem %s1458, 336
  %v1473 = vld [vmem:[%s1472] ss:$2 sm:$0xff]
  %s1474 = scalar_lea.vmem %s1458, 432
  %v1475 = vld [vmem:[%s1474] ss:$2 sm:$0xff]
  %s1476 = scalar_lea.vmem %s1458, 480
  %v1477 = vld [vmem:[%s1476] ss:$2 sm:$0xff]
  %s1478 = scalar_lea.vmem %s1458, 528
  %v1479 = vld [vmem:[%s1478] ss:$2 sm:$0xff]
  %s1480 = scalar_lea.vmem %s1458, 576
  %v1481 = vld [vmem:[%s1480] ss:$2 sm:$0xff]
  %s1482 = scalar_lea.vmem %s1458, 624
  %v1483 = vld [vmem:[%s1482] ss:$2 sm:$0xff]
  %s1484 = scalar_lea.vmem %s1458, 672
  %v1485 = vld [vmem:[%s1484] ss:$2 sm:$0xff]
  %s1486 = scalar_lea.vmem %s1458, 720
  %v1487 = vld [vmem:[%s1486] ss:$2 sm:$0xff]
  %s1488 = scalar_lea.vmem %s1458, 768
  %v1489 = vld [vmem:[%s1488] ss:$2 sm:$0xff]
  %s1490 = scalar_lea.vmem %s1, 24
  %v1491 = vld [vmem:[%s1490] sm:$0xf]
  %v1493 = vsel %vm80, %v1459, 0
  %v1496 = vsel %vm80, %v1461, 0
  %v1499 = vsel %vm80, %v1463, 0
  %v1502 = vsel %vm80, %v1465, 0
  %v1505 = vsel %vm80, %v1467, 0
  %v1508 = vsel %vm80, %v1469, 0
  %v1511 = vsel %vm80, %v1471, 0
  %v1514 = vsel %vm80, %v1473, 0
  %v1517 = vsel %vm80, %v1475, 0
  %v1520 = vsel %vm80, %v1477, 0
  %v1523 = vsel %vm80, %v1479, 0
  %v1526 = vsel %vm80, %v1481, 0
  %v1529 = vsel %vm80, %v1483, 0
  %v1532 = vsel %vm80, %v1485, 0
  %v1535 = vsel %vm80, %v1487, 0
  %v1538 = vsel %vm80, %v1489, 0
  %v1541 = vsel %vm129, %v1491, 0
  %1543 = vmatprep.subr.mxu0 0.0
  %1544 = vmatpush1.msra.mxu0 0.0
  %1545 = vmatprep.subr.mxu0 0.0
  %1546 = vmatpush1.msra.mxu0 0.0
  %1547 = vmatprep.subr.mxu0 0.0
  %1548 = vmatpush1.msra.mxu0 0.0
  %1549 = vmatprep.subr.mxu0 0.0
  %1550 = vmatpush1.msra.mxu0 0.0
  %1551 = vmatprep.subr.mxu0 0.0
  %1552 = vmatpush1.msra.mxu0 0.0
  %1553 = vmatprep.subr.mxu0 0.0
  %1554 = vmatpush1.msra.mxu0 0.0
  %1555 = vmatprep.subr.mxu0 0.0
  %1556 = vmatpush1.msra.mxu0 0.0
  %1557 = vmatprep.subr.mxu0 0.0
  %1558 = vmatpush1.msra.mxu0 0.0
  %1559 = vmatprep.subr.mxu0 0.0
  %1560 = vmatpush1.msra.mxu0 0.0
  %1561 = vmatprep.subr.mxu0 0.0
  %1562 = vmatpush1.msra.mxu0 0.0
  %1563 = vmatprep.subr.mxu0 0.0
  %1564 = vmatpush1.msra.mxu0 0.0
  %1565 = vmatprep.subr.mxu0 0.0
  %1566 = vmatpush1.msra.mxu0 0.0
  %1567 = vmatprep.subr.mxu0 0.0
  %1568 = vmatpush1.msra.mxu0 0.0
  %1569 = vmatprep.subr.mxu0 0.0
  %1570 = vmatpush1.msra.mxu0 0.0
  %1571 = vmatprep.subr.mxu0 0.0
  %1572 = vmatpush1.msra.mxu0 0.0
  %1573 = vmatprep.subr.mxu0 0.0
  %1574 = vmatpush1.msra.mxu0 %v1541
  %1575 = vmatprep.subr.mxu0 0.0
  %1576 = vmatpush2.msra.mxu0 0.0
  %1577 = vmatprep.subr.mxu0 0.0
  %1578 = vmatpush2.msra.mxu0 0.0
  %1579 = vmatprep.subr.mxu0 0.0
  %1580 = vmatpush2.msra.mxu0 0.0
  %1581 = vmatprep.subr.mxu0 0.0
  %1582 = vmatpush2.msra.mxu0 0.0
  %1583 = vmatprep.subr.mxu0 0.0
  %1584 = vmatpush2.msra.mxu0 0.0
  %1585 = vmatprep.subr.mxu0 0.0
  %1586 = vmatpush2.msra.mxu0 0.0
  %1587 = vmatprep.subr.mxu0 0.0
  %1588 = vmatpush2.msra.mxu0 0.0
  %1589 = vmatprep.subr.mxu0 0.0
  %1590 = vmatpush2.msra.mxu0 0.0
  %1591 = vmatprep.subr.mxu0 0.0
  %1592 = vmatpush2.msra.mxu0 0.0
  %1593 = vmatprep.subr.mxu0 0.0
  %1594 = vmatpush2.msra.mxu0 0.0
  %1595 = vmatprep.subr.mxu0 0.0
  %1596 = vmatpush2.msra.mxu0 0.0
  %1597 = vmatprep.subr.mxu0 0.0
  %1598 = vmatpush2.msra.mxu0 0.0
  %1599 = vmatprep.subr.mxu0 0.0
  %1600 = vmatpush2.msra.mxu0 0.0
  %1601 = vmatprep.subr.mxu0 0.0
  %1602 = vmatpush2.msra.mxu0 0.0
  %1603 = vmatprep.subr.mxu0 0.0
  %1604 = vmatpush2.msra.mxu0 0.0
  %1605 = vmatprep.subr.mxu0 0.0
  %1606 = vmatpush2.msra.mxu0 0.0
  %1607 = vmatprep.mubr.f32.mxu0 0.0
  %1608 = vmatmul.mubr.f32.gmra.mxu0 %v1493
  %v1609 = vpop.f32.mrf.mxu0
  %v1610 = vadd.f32 0.0, %v1609
  %v1611 = vpop.f32.mrf.mxu0
  %1612 = vmatprep.mubr.f32.mxu0 0.0
  %1613 = vmatmul.mubr.f32.gmra.mxu0 %v1496
  %v1614 = vpop.f32.mrf.mxu0
  %v1615 = vadd.f32 0.0, %v1614
  %v1616 = vpop.f32.mrf.mxu0
  %1617 = vmatprep.mubr.f32.mxu0 0.0
  %1618 = vmatmul.mubr.f32.gmra.mxu0 %v1499
  %v1619 = vpop.f32.mrf.mxu0
  %v1620 = vadd.f32 0.0, %v1619
  %v1621 = vpop.f32.mrf.mxu0
  %1622 = vmatprep.mubr.f32.mxu0 0.0
  %1623 = vmatmul.mubr.f32.gmra.mxu0 %v1502
  %v1624 = vpop.f32.mrf.mxu0
  %v1625 = vadd.f32 0.0, %v1624
  %v1626 = vpop.f32.mrf.mxu0
  %1627 = vmatprep.mubr.f32.mxu0 0.0
  %1628 = vmatmul.mubr.f32.gmra.mxu0 %v1505
  %v1629 = vpop.f32.mrf.mxu0
  %v1630 = vadd.f32 0.0, %v1629
  %v1631 = vpop.f32.mrf.mxu0
  %1632 = vmatprep.mubr.f32.mxu0 0.0
  %1633 = vmatmul.mubr.f32.gmra.mxu0 %v1508
  %v1634 = vpop.f32.mrf.mxu0
  %v1635 = vadd.f32 0.0, %v1634
  %v1636 = vpop.f32.mrf.mxu0
  %1637 = vmatprep.mubr.f32.mxu0 0.0
  %1638 = vmatmul.mubr.f32.gmra.mxu0 %v1511
  %v1639 = vpop.f32.mrf.mxu0
  %v1640 = vadd.f32 0.0, %v1639
  %v1641 = vpop.f32.mrf.mxu0
  %1642 = vmatprep.mubr.f32.mxu0 0.0
  %1643 = vmatmul.mubr.f32.gmra.mxu0 %v1514
  %v1644 = vpop.f32.mrf.mxu0
  %v1645 = vadd.f32 0.0, %v1644
  %v1646 = vpop.f32.mrf.mxu0
  %1647 = vmatprep.mubr.f32.mxu0 0.0
  %1648 = vmatmul.mubr.f32.gmra.mxu0 %v1517
  %v1649 = vpop.f32.mrf.mxu0
  %v1650 = vadd.f32 0.0, %v1649
  %v1651 = vpop.f32.mrf.mxu0
  %1652 = vmatprep.mubr.f32.mxu0 0.0
  %1653 = vmatmul.mubr.f32.gmra.mxu0 %v1520
  %v1654 = vpop.f32.mrf.mxu0
  %v1655 = vadd.f32 0.0, %v1654
  %v1656 = vpop.f32.mrf.mxu0
  %1657 = vmatprep.mubr.f32.mxu0 0.0
  %1658 = vmatmul.mubr.f32.gmra.mxu0 %v1523
  %v1659 = vpop.f32.mrf.mxu0
  %v1660 = vadd.f32 0.0, %v1659
  %v1661 = vpop.f32.mrf.mxu0
  %1662 = vmatprep.mubr.f32.mxu0 0.0
  %1663 = vmatmul.mubr.f32.gmra.mxu0 %v1526
  %v1664 = vpop.f32.mrf.mxu0
  %v1665 = vadd.f32 0.0, %v1664
  %v1666 = vpop.f32.mrf.mxu0
  %1667 = vmatprep.mubr.f32.mxu0 0.0
  %1668 = vmatmul.mubr.f32.gmra.mxu0 %v1529
  %v1669 = vpop.f32.mrf.mxu0
  %v1670 = vadd.f32 0.0, %v1669
  %v1671 = vpop.f32.mrf.mxu0
  %1672 = vmatprep.mubr.f32.mxu0 0.0
  %1673 = vmatmul.mubr.f32.gmra.mxu0 %v1532
  %v1674 = vpop.f32.mrf.mxu0
  %v1675 = vadd.f32 0.0, %v1674
  %v1676 = vpop.f32.mrf.mxu0
  %1677 = vmatprep.mubr.f32.mxu0 0.0
  %1678 = vmatmul.mubr.f32.gmra.mxu0 %v1535
  %v1679 = vpop.f32.mrf.mxu0
  %v1680 = vadd.f32 0.0, %v1679
  %v1681 = vpop.f32.mrf.mxu0
  %1682 = vmatprep.mubr.f32.mxu0 0.0
  %1683 = vmatmul.mubr.f32.gmra.mxu0 %v1538
  %v1684 = vpop.f32.mrf.mxu0
  %v1685 = vadd.f32 0.0, %v1684
  %v1686 = vpop.f32.mrf.mxu0
  %1687 = vdwg.mxu0
  %v1688 = vadd.f32 %v1442, %v1610
  %v1689 = vadd.f32 %v1443, %v1615
  %v1690 = vadd.f32 %v1444, %v1620
  %v1691 = vadd.f32 %v1445, %v1625
  %v1692 = vadd.f32 %v1446, %v1630
  %v1693 = vadd.f32 %v1447, %v1635
  %v1694 = vadd.f32 %v1448, %v1640
  %v1695 = vadd.f32 %v1449, %v1645
  %v1696 = vadd.f32 %v1450, %v1650
  %v1697 = vadd.f32 %v1451, %v1655
  %v1698 = vadd.f32 %v1452, %v1660
  %v1699 = vadd.f32 %v1453, %v1665
  %v1700 = vadd.f32 %v1454, %v1670
  %v1701 = vadd.f32 %v1455, %v1675
  %v1702 = vadd.f32 %v1456, %v1680
  %v1703 = vadd.f32 %v1457, %v1685
  %s1704 = scalar_lea.vmem %s1458, 1
  %v1705 = vld [vmem:[%s1704] ss:$2 sm:$0xff]
  %s1706 = scalar_lea.vmem %s1458, 49
  %v1707 = vld [vmem:[%s1706] ss:$2 sm:$0xff]
  %s1708 = scalar_lea.vmem %s1458, 97
  %v1709 = vld [vmem:[%s1708] ss:$2 sm:$0xff]
  %s1710 = scalar_lea.vmem %s1458, 145
  %v1711 = vld [vmem:[%s1710] ss:$2 sm:$0xff]
  %s1712 = scalar_lea.vmem %s1458, 193
  %v1713 = vld [vmem:[%s1712] ss:$2 sm:$0xff]
  %s1714 = scalar_lea.vmem %s1458, 241
  %v1715 = vld [vmem:[%s1714] ss:$2 sm:$0xff]
  %s1716 = scalar_lea.vmem %s1458, 289
  %v1717 = vld [vmem:[%s1716] ss:$2 sm:$0xff]
  %s1718 = scalar_lea.vmem %s1458, 337
  %v1719 = vld [vmem:[%s1718] ss:$2 sm:$0xff]
  %s1720 = scalar_lea.vmem %s1458, 433
  %v1721 = vld [vmem:[%s1720] ss:$2 sm:$0xff]
  %s1722 = scalar_lea.vmem %s1458, 481
  %v1723 = vld [vmem:[%s1722] ss:$2 sm:$0xff]
  %s1724 = scalar_lea.vmem %s1458, 529
  %v1725 = vld [vmem:[%s1724] ss:$2 sm:$0xff]
  %s1726 = scalar_lea.vmem %s1458, 577
  %v1727 = vld [vmem:[%s1726] ss:$2 sm:$0xff]
  %s1728 = scalar_lea.vmem %s1458, 625
  %v1729 = vld [vmem:[%s1728] ss:$2 sm:$0xff]
  %s1730 = scalar_lea.vmem %s1458, 673
  %v1731 = vld [vmem:[%s1730] ss:$2 sm:$0xff]
  %s1732 = scalar_lea.vmem %s1458, 721
  %v1733 = vld [vmem:[%s1732] ss:$2 sm:$0xff]
  %s1734 = scalar_lea.vmem %s1458, 769
  %v1735 = vld [vmem:[%s1734] ss:$2 sm:$0xff]
  %s1736 = scalar_lea.vmem %s1, 28
  %v1737 = vld [vmem:[%s1736] sm:$0xf]
  %v1739 = vsel %vm80, %v1705, 0
  %v1742 = vsel %vm80, %v1707, 0
  %v1745 = vsel %vm80, %v1709, 0
  %v1748 = vsel %vm80, %v1711, 0
  %v1751 = vsel %vm80, %v1713, 0
  %v1754 = vsel %vm80, %v1715, 0
  %v1757 = vsel %vm80, %v1717, 0
  %v1760 = vsel %vm80, %v1719, 0
  %v1763 = vsel %vm80, %v1721, 0
  %v1766 = vsel %vm80, %v1723, 0
  %v1769 = vsel %vm80, %v1725, 0
  %v1772 = vsel %vm80, %v1727, 0
  %v1775 = vsel %vm80, %v1729, 0
  %v1778 = vsel %vm80, %v1731, 0
  %v1781 = vsel %vm80, %v1733, 0
  %v1784 = vsel %vm80, %v1735, 0
  %v1787 = vsel %vm129, %v1737, 0
  %1789 = vmatprep.subr.mxu0 0.0
  %1790 = vmatpush1.msra.mxu0 0.0
  %1791 = vmatprep.subr.mxu0 0.0
  %1792 = vmatpush1.msra.mxu0 0.0
  %1793 = vmatprep.subr.mxu0 0.0
  %1794 = vmatpush1.msra.mxu0 0.0
  %1795 = vmatprep.subr.mxu0 0.0
  %1796 = vmatpush1.msra.mxu0 0.0
  %1797 = vmatprep.subr.mxu0 0.0
  %1798 = vmatpush1.msra.mxu0 0.0
  %1799 = vmatprep.subr.mxu0 0.0
  %1800 = vmatpush1.msra.mxu0 0.0
  %1801 = vmatprep.subr.mxu0 0.0
  %1802 = vmatpush1.msra.mxu0 0.0
  %1803 = vmatprep.subr.mxu0 0.0
  %1804 = vmatpush1.msra.mxu0 0.0
  %1805 = vmatprep.subr.mxu0 0.0
  %1806 = vmatpush1.msra.mxu0 0.0
  %1807 = vmatprep.subr.mxu0 0.0
  %1808 = vmatpush1.msra.mxu0 0.0
  %1809 = vmatprep.subr.mxu0 0.0
  %1810 = vmatpush1.msra.mxu0 0.0
  %1811 = vmatprep.subr.mxu0 0.0
  %1812 = vmatpush1.msra.mxu0 0.0
  %1813 = vmatprep.subr.mxu0 0.0
  %1814 = vmatpush1.msra.mxu0 0.0
  %1815 = vmatprep.subr.mxu0 0.0
  %1816 = vmatpush1.msra.mxu0 0.0
  %1817 = vmatprep.subr.mxu0 0.0
  %1818 = vmatpush1.msra.mxu0 0.0
  %1819 = vmatprep.subr.mxu0 0.0
  %1820 = vmatpush1.msra.mxu0 %v1787
  %1821 = vmatprep.subr.mxu0 0.0
  %1822 = vmatpush2.msra.mxu0 0.0
  %1823 = vmatprep.subr.mxu0 0.0
  %1824 = vmatpush2.msra.mxu0 0.0
  %1825 = vmatprep.subr.mxu0 0.0
  %1826 = vmatpush2.msra.mxu0 0.0
  %1827 = vmatprep.subr.mxu0 0.0
  %1828 = vmatpush2.msra.mxu0 0.0
  %1829 = vmatprep.subr.mxu0 0.0
  %1830 = vmatpush2.msra.mxu0 0.0
  %1831 = vmatprep.subr.mxu0 0.0
  %1832 = vmatpush2.msra.mxu0 0.0
  %1833 = vmatprep.subr.mxu0 0.0
  %1834 = vmatpush2.msra.mxu0 0.0
  %1835 = vmatprep.subr.mxu0 0.0
  %1836 = vmatpush2.msra.mxu0 0.0
  %1837 = vmatprep.subr.mxu0 0.0
  %1838 = vmatpush2.msra.mxu0 0.0
  %1839 = vmatprep.subr.mxu0 0.0
  %1840 = vmatpush2.msra.mxu0 0.0
  %1841 = vmatprep.subr.mxu0 0.0
  %1842 = vmatpush2.msra.mxu0 0.0
  %1843 = vmatprep.subr.mxu0 0.0
  %1844 = vmatpush2.msra.mxu0 0.0
  %1845 = vmatprep.subr.mxu0 0.0
  %1846 = vmatpush2.msra.mxu0 0.0
  %1847 = vmatprep.subr.mxu0 0.0
  %1848 = vmatpush2.msra.mxu0 0.0
  %1849 = vmatprep.subr.mxu0 0.0
  %1850 = vmatpush2.msra.mxu0 0.0
  %1851 = vmatprep.subr.mxu0 0.0
  %1852 = vmatpush2.msra.mxu0 0.0
  %1853 = vmatprep.mubr.f32.mxu0 0.0
  %1854 = vmatmul.mubr.f32.gmra.mxu0 %v1739
  %v1855 = vpop.f32.mrf.mxu0
  %v1856 = vadd.f32 0.0, %v1855
  %v1857 = vpop.f32.mrf.mxu0
  %1858 = vmatprep.mubr.f32.mxu0 0.0
  %1859 = vmatmul.mubr.f32.gmra.mxu0 %v1742
  %v1860 = vpop.f32.mrf.mxu0
  %v1861 = vadd.f32 0.0, %v1860
  %v1862 = vpop.f32.mrf.mxu0
  %1863 = vmatprep.mubr.f32.mxu0 0.0
  %1864 = vmatmul.mubr.f32.gmra.mxu0 %v1745
  %v1865 = vpop.f32.mrf.mxu0
  %v1866 = vadd.f32 0.0, %v1865
  %v1867 = vpop.f32.mrf.mxu0
  %1868 = vmatprep.mubr.f32.mxu0 0.0
  %1869 = vmatmul.mubr.f32.gmra.mxu0 %v1748
  %v1870 = vpop.f32.mrf.mxu0
  %v1871 = vadd.f32 0.0, %v1870
  %v1872 = vpop.f32.mrf.mxu0
  %1873 = vmatprep.mubr.f32.mxu0 0.0
  %1874 = vmatmul.mubr.f32.gmra.mxu0 %v1751
  %v1875 = vpop.f32.mrf.mxu0
  %v1876 = vadd.f32 0.0, %v1875
  %v1877 = vpop.f32.mrf.mxu0
  %1878 = vmatprep.mubr.f32.mxu0 0.0
  %1879 = vmatmul.mubr.f32.gmra.mxu0 %v1754
  %v1880 = vpop.f32.mrf.mxu0
  %v1881 = vadd.f32 0.0, %v1880
  %v1882 = vpop.f32.mrf.mxu0
  %1883 = vmatprep.mubr.f32.mxu0 0.0
  %1884 = vmatmul.mubr.f32.gmra.mxu0 %v1757
  %v1885 = vpop.f32.mrf.mxu0
  %v1886 = vadd.f32 0.0, %v1885
  %v1887 = vpop.f32.mrf.mxu0
  %1888 = vmatprep.mubr.f32.mxu0 0.0
  %1889 = vmatmul.mubr.f32.gmra.mxu0 %v1760
  %v1890 = vpop.f32.mrf.mxu0
  %v1891 = vadd.f32 0.0, %v1890
  %v1892 = vpop.f32.mrf.mxu0
  %1893 = vmatprep.mubr.f32.mxu0 0.0
  %1894 = vmatmul.mubr.f32.gmra.mxu0 %v1763
  %v1895 = vpop.f32.mrf.mxu0
  %v1896 = vadd.f32 0.0, %v1895
  %v1897 = vpop.f32.mrf.mxu0
  %1898 = vmatprep.mubr.f32.mxu0 0.0
  %1899 = vmatmul.mubr.f32.gmra.mxu0 %v1766
  %v1900 = vpop.f32.mrf.mxu0
  %v1901 = vadd.f32 0.0, %v1900
  %v1902 = vpop.f32.mrf.mxu0
  %1903 = vmatprep.mubr.f32.mxu0 0.0
  %1904 = vmatmul.mubr.f32.gmra.mxu0 %v1769
  %v1905 = vpop.f32.mrf.mxu0
  %v1906 = vadd.f32 0.0, %v1905
  %v1907 = vpop.f32.mrf.mxu0
  %1908 = vmatprep.mubr.f32.mxu0 0.0
  %1909 = vmatmul.mubr.f32.gmra.mxu0 %v1772
  %v1910 = vpop.f32.mrf.mxu0
  %v1911 = vadd.f32 0.0, %v1910
  %v1912 = vpop.f32.mrf.mxu0
  %1913 = vmatprep.mubr.f32.mxu0 0.0
  %1914 = vmatmul.mubr.f32.gmra.mxu0 %v1775
  %v1915 = vpop.f32.mrf.mxu0
  %v1916 = vadd.f32 0.0, %v1915
  %v1917 = vpop.f32.mrf.mxu0
  %1918 = vmatprep.mubr.f32.mxu0 0.0
  %1919 = vmatmul.mubr.f32.gmra.mxu0 %v1778
  %v1920 = vpop.f32.mrf.mxu0
  %v1921 = vadd.f32 0.0, %v1920
  %v1922 = vpop.f32.mrf.mxu0
  %1923 = vmatprep.mubr.f32.mxu0 0.0
  %1924 = vmatmul.mubr.f32.gmra.mxu0 %v1781
  %v1925 = vpop.f32.mrf.mxu0
  %v1926 = vadd.f32 0.0, %v1925
  %v1927 = vpop.f32.mrf.mxu0
  %1928 = vmatprep.mubr.f32.mxu0 0.0
  %1929 = vmatmul.mubr.f32.gmra.mxu0 %v1784
  %v1930 = vpop.f32.mrf.mxu0
  %v1931 = vadd.f32 0.0, %v1930
  %v1932 = vpop.f32.mrf.mxu0
  %1933 = vdwg.mxu0
  %v1934 = vadd.f32 %v1688, %v1856
  %v1935 = vadd.f32 %v1689, %v1861
  %v1936 = vadd.f32 %v1690, %v1866
  %v1937 = vadd.f32 %v1691, %v1871
  %v1938 = vadd.f32 %v1692, %v1876
  %v1939 = vadd.f32 %v1693, %v1881
  %v1940 = vadd.f32 %v1694, %v1886
  %v1941 = vadd.f32 %v1695, %v1891
  %v1942 = vadd.f32 %v1696, %v1896
  %v1943 = vadd.f32 %v1697, %v1901
  %v1944 = vadd.f32 %v1698, %v1906
  %v1945 = vadd.f32 %v1699, %v1911
  %v1946 = vadd.f32 %v1700, %v1916
  %v1947 = vadd.f32 %v1701, %v1921
  %v1948 = vadd.f32 %v1702, %v1926
  %v1949 = vadd.f32 %v1703, %v1931
  %s1950 = scalar_lea.vmem %s1458, 2
  %v1951 = vld [vmem:[%s1950] ss:$2 sm:$0xff]
  %s1952 = scalar_lea.vmem %s1458, 50
  %v1953 = vld [vmem:[%s1952] ss:$2 sm:$0xff]
  %s1954 = scalar_lea.vmem %s1458, 98
  %v1955 = vld [vmem:[%s1954] ss:$2 sm:$0xff]
  %s1956 = scalar_lea.vmem %s1458, 146
  %v1957 = vld [vmem:[%s1956] ss:$2 sm:$0xff]
  %s1958 = scalar_lea.vmem %s1458, 194
  %v1959 = vld [vmem:[%s1958] ss:$2 sm:$0xff]
  %s1960 = scalar_lea.vmem %s1458, 242
  %v1961 = vld [vmem:[%s1960] ss:$2 sm:$0xff]
  %s1962 = scalar_lea.vmem %s1458, 290
  %v1963 = vld [vmem:[%s1962] ss:$2 sm:$0xff]
  %s1964 = scalar_lea.vmem %s1458, 338
  %v1965 = vld [vmem:[%s1964] ss:$2 sm:$0xff]
  %s1966 = scalar_lea.vmem %s1458, 434
  %v1967 = vld [vmem:[%s1966] ss:$2 sm:$0xff]
  %s1968 = scalar_lea.vmem %s1458, 482
  %v1969 = vld [vmem:[%s1968] ss:$2 sm:$0xff]
  %s1970 = scalar_lea.vmem %s1458, 530
  %v1971 = vld [vmem:[%s1970] ss:$2 sm:$0xff]
  %s1972 = scalar_lea.vmem %s1458, 578
  %v1973 = vld [vmem:[%s1972] ss:$2 sm:$0xff]
  %s1974 = scalar_lea.vmem %s1458, 626
  %v1975 = vld [vmem:[%s1974] ss:$2 sm:$0xff]
  %s1976 = scalar_lea.vmem %s1458, 674
  %v1977 = vld [vmem:[%s1976] ss:$2 sm:$0xff]
  %s1978 = scalar_lea.vmem %s1458, 722
  %v1979 = vld [vmem:[%s1978] ss:$2 sm:$0xff]
  %s1980 = scalar_lea.vmem %s1458, 770
  %v1981 = vld [vmem:[%s1980] ss:$2 sm:$0xff]
  %s1982 = scalar_lea.vmem %s1, 32
  %v1983 = vld [vmem:[%s1982] sm:$0xf]
  %v1985 = vsel %vm80, %v1951, 0
  %v1988 = vsel %vm80, %v1953, 0
  %v1991 = vsel %vm80, %v1955, 0
  %v1994 = vsel %vm80, %v1957, 0
  %v1997 = vsel %vm80, %v1959, 0
  %v2000 = vsel %vm80, %v1961, 0
  %v2003 = vsel %vm80, %v1963, 0
  %v2006 = vsel %vm80, %v1965, 0
  %v2009 = vsel %vm80, %v1967, 0
  %v2012 = vsel %vm80, %v1969, 0
  %v2015 = vsel %vm80, %v1971, 0
  %v2018 = vsel %vm80, %v1973, 0
  %v2021 = vsel %vm80, %v1975, 0
  %v2024 = vsel %vm80, %v1977, 0
  %v2027 = vsel %vm80, %v1979, 0
  %v2030 = vsel %vm80, %v1981, 0
  %v2033 = vsel %vm129, %v1983, 0
  %2035 = vmatprep.subr.mxu0 0.0
  %2036 = vmatpush1.msra.mxu0 0.0
  %2037 = vmatprep.subr.mxu0 0.0
  %2038 = vmatpush1.msra.mxu0 0.0
  %2039 = vmatprep.subr.mxu0 0.0
  %2040 = vmatpush1.msra.mxu0 0.0
  %2041 = vmatprep.subr.mxu0 0.0
  %2042 = vmatpush1.msra.mxu0 0.0
  %2043 = vmatprep.subr.mxu0 0.0
  %2044 = vmatpush1.msra.mxu0 0.0
  %2045 = vmatprep.subr.mxu0 0.0
  %2046 = vmatpush1.msra.mxu0 0.0
  %2047 = vmatprep.subr.mxu0 0.0
  %2048 = vmatpush1.msra.mxu0 0.0
  %2049 = vmatprep.subr.mxu0 0.0
  %2050 = vmatpush1.msra.mxu0 0.0
  %2051 = vmatprep.subr.mxu0 0.0
  %2052 = vmatpush1.msra.mxu0 0.0
  %2053 = vmatprep.subr.mxu0 0.0
  %2054 = vmatpush1.msra.mxu0 0.0
  %2055 = vmatprep.subr.mxu0 0.0
  %2056 = vmatpush1.msra.mxu0 0.0
  %2057 = vmatprep.subr.mxu0 0.0
  %2058 = vmatpush1.msra.mxu0 0.0
  %2059 = vmatprep.subr.mxu0 0.0
  %2060 = vmatpush1.msra.mxu0 0.0
  %2061 = vmatprep.subr.mxu0 0.0
  %2062 = vmatpush1.msra.mxu0 0.0
  %2063 = vmatprep.subr.mxu0 0.0
  %2064 = vmatpush1.msra.mxu0 0.0
  %2065 = vmatprep.subr.mxu0 0.0
  %2066 = vmatpush1.msra.mxu0 %v2033
  %2067 = vmatprep.subr.mxu0 0.0
  %2068 = vmatpush2.msra.mxu0 0.0
  %2069 = vmatprep.subr.mxu0 0.0
  %2070 = vmatpush2.msra.mxu0 0.0
  %2071 = vmatprep.subr.mxu0 0.0
  %2072 = vmatpush2.msra.mxu0 0.0
  %2073 = vmatprep.subr.mxu0 0.0
  %2074 = vmatpush2.msra.mxu0 0.0
  %2075 = vmatprep.subr.mxu0 0.0
  %2076 = vmatpush2.msra.mxu0 0.0
  %2077 = vmatprep.subr.mxu0 0.0
  %2078 = vmatpush2.msra.mxu0 0.0
  %2079 = vmatprep.subr.mxu0 0.0
  %2080 = vmatpush2.msra.mxu0 0.0
  %2081 = vmatprep.subr.mxu0 0.0
  %2082 = vmatpush2.msra.mxu0 0.0
  %2083 = vmatprep.subr.mxu0 0.0
  %2084 = vmatpush2.msra.mxu0 0.0
  %2085 = vmatprep.subr.mxu0 0.0
  %2086 = vmatpush2.msra.mxu0 0.0
  %2087 = vmatprep.subr.mxu0 0.0
  %2088 = vmatpush2.msra.mxu0 0.0
  %2089 = vmatprep.subr.mxu0 0.0
  %2090 = vmatpush2.msra.mxu0 0.0
  %2091 = vmatprep.subr.mxu0 0.0
  %2092 = vmatpush2.msra.mxu0 0.0
  %2093 = vmatprep.subr.mxu0 0.0
  %2094 = vmatpush2.msra.mxu0 0.0
  %2095 = vmatprep.subr.mxu0 0.0
  %2096 = vmatpush2.msra.mxu0 0.0
  %2097 = vmatprep.subr.mxu0 0.0
  %2098 = vmatpush2.msra.mxu0 0.0
  %2099 = vmatprep.mubr.f32.mxu0 0.0
  %2100 = vmatmul.mubr.f32.gmra.mxu0 %v1985
  %v2101 = vpop.f32.mrf.mxu0
  %v2102 = vadd.f32 0.0, %v2101
  %v2103 = vpop.f32.mrf.mxu0
  %2104 = vmatprep.mubr.f32.mxu0 0.0
  %2105 = vmatmul.mubr.f32.gmra.mxu0 %v1988
  %v2106 = vpop.f32.mrf.mxu0
  %v2107 = vadd.f32 0.0, %v2106
  %v2108 = vpop.f32.mrf.mxu0
  %2109 = vmatprep.mubr.f32.mxu0 0.0
  %2110 = vmatmul.mubr.f32.gmra.mxu0 %v1991
  %v2111 = vpop.f32.mrf.mxu0
  %v2112 = vadd.f32 0.0, %v2111
  %v2113 = vpop.f32.mrf.mxu0
  %2114 = vmatprep.mubr.f32.mxu0 0.0
  %2115 = vmatmul.mubr.f32.gmra.mxu0 %v1994
  %v2116 = vpop.f32.mrf.mxu0
  %v2117 = vadd.f32 0.0, %v2116
  %v2118 = vpop.f32.mrf.mxu0
  %2119 = vmatprep.mubr.f32.mxu0 0.0
  %2120 = vmatmul.mubr.f32.gmra.mxu0 %v1997
  %v2121 = vpop.f32.mrf.mxu0
  %v2122 = vadd.f32 0.0, %v2121
  %v2123 = vpop.f32.mrf.mxu0
  %2124 = vmatprep.mubr.f32.mxu0 0.0
  %2125 = vmatmul.mubr.f32.gmra.mxu0 %v2000
  %v2126 = vpop.f32.mrf.mxu0
  %v2127 = vadd.f32 0.0, %v2126
  %v2128 = vpop.f32.mrf.mxu0
  %2129 = vmatprep.mubr.f32.mxu0 0.0
  %2130 = vmatmul.mubr.f32.gmra.mxu0 %v2003
  %v2131 = vpop.f32.mrf.mxu0
  %v2132 = vadd.f32 0.0, %v2131
  %v2133 = vpop.f32.mrf.mxu0
  %2134 = vmatprep.mubr.f32.mxu0 0.0
  %2135 = vmatmul.mubr.f32.gmra.mxu0 %v2006
  %v2136 = vpop.f32.mrf.mxu0
  %v2137 = vadd.f32 0.0, %v2136
  %v2138 = vpop.f32.mrf.mxu0
  %2139 = vmatprep.mubr.f32.mxu0 0.0
  %2140 = vmatmul.mubr.f32.gmra.mxu0 %v2009
  %v2141 = vpop.f32.mrf.mxu0
  %v2142 = vadd.f32 0.0, %v2141
  %v2143 = vpop.f32.mrf.mxu0
  %2144 = vmatprep.mubr.f32.mxu0 0.0
  %2145 = vmatmul.mubr.f32.gmra.mxu0 %v2012
  %v2146 = vpop.f32.mrf.mxu0
  %v2147 = vadd.f32 0.0, %v2146
  %v2148 = vpop.f32.mrf.mxu0
  %2149 = vmatprep.mubr.f32.mxu0 0.0
  %2150 = vmatmul.mubr.f32.gmra.mxu0 %v2015
  %v2151 = vpop.f32.mrf.mxu0
  %v2152 = vadd.f32 0.0, %v2151
  %v2153 = vpop.f32.mrf.mxu0
  %2154 = vmatprep.mubr.f32.mxu0 0.0
  %2155 = vmatmul.mubr.f32.gmra.mxu0 %v2018
  %v2156 = vpop.f32.mrf.mxu0
  %v2157 = vadd.f32 0.0, %v2156
  %v2158 = vpop.f32.mrf.mxu0
  %2159 = vmatprep.mubr.f32.mxu0 0.0
  %2160 = vmatmul.mubr.f32.gmra.mxu0 %v2021
  %v2161 = vpop.f32.mrf.mxu0
  %v2162 = vadd.f32 0.0, %v2161
  %v2163 = vpop.f32.mrf.mxu0
  %2164 = vmatprep.mubr.f32.mxu0 0.0
  %2165 = vmatmul.mubr.f32.gmra.mxu0 %v2024
  %v2166 = vpop.f32.mrf.mxu0
  %v2167 = vadd.f32 0.0, %v2166
  %v2168 = vpop.f32.mrf.mxu0
  %2169 = vmatprep.mubr.f32.mxu0 0.0
  %2170 = vmatmul.mubr.f32.gmra.mxu0 %v2027
  %v2171 = vpop.f32.mrf.mxu0
  %v2172 = vadd.f32 0.0, %v2171
  %v2173 = vpop.f32.mrf.mxu0
  %2174 = vmatprep.mubr.f32.mxu0 0.0
  %2175 = vmatmul.mubr.f32.gmra.mxu0 %v2030
  %v2176 = vpop.f32.mrf.mxu0
  %v2177 = vadd.f32 0.0, %v2176
  %v2178 = vpop.f32.mrf.mxu0
  %2179 = vdwg.mxu0
  %v2180 = vadd.f32 %v1934, %v2102
  %v2181 = vadd.f32 %v1935, %v2107
  %v2182 = vadd.f32 %v1936, %v2112
  %v2183 = vadd.f32 %v1937, %v2117
  %v2184 = vadd.f32 %v1938, %v2122
  %v2185 = vadd.f32 %v1939, %v2127
  %v2186 = vadd.f32 %v1940, %v2132
  %v2187 = vadd.f32 %v1941, %v2137
  %v2188 = vadd.f32 %v1942, %v2142
  %v2189 = vadd.f32 %v1943, %v2147
  %v2190 = vadd.f32 %v1944, %v2152
  %v2191 = vadd.f32 %v1945, %v2157
  %v2192 = vadd.f32 %v1946, %v2162
  %v2193 = vadd.f32 %v1947, %v2167
  %v2194 = vadd.f32 %v1948, %v2172
  %v2195 = vadd.f32 %v1949, %v2177
  %v2196 = vld [vmem:[%s2] sm:$0x1]
  %v2198 = vlaneseq
  %v2199 = vshrl.u32 %v2198, 7
  %v2200 = vsub.s32 0, %v2199
  %v2201 = vrot.slane %v2196, %v2200
  %v2203 = vadd.f32 %v2180, %v2201
  %v2204 = vadd.f32 %v2181, %v2201
  %v2205 = vadd.f32 %v2182, %v2201
  %v2206 = vadd.f32 %v2183, %v2201
  %v2207 = vadd.f32 %v2184, %v2201
  %v2208 = vadd.f32 %v2185, %v2201
  %v2209 = vadd.f32 %v2186, %v2201
  %v2210 = vadd.f32 %v2187, %v2201
  %v2211 = vadd.f32 %v2188, %v2201
  %v2212 = vadd.f32 %v2189, %v2201
  %v2213 = vadd.f32 %v2190, %v2201
  %v2214 = vadd.f32 %v2191, %v2201
  %v2215 = vadd.f32 %v2192, %v2201
  %v2216 = vadd.f32 %v2193, %v2201
  %v2217 = vadd.f32 %v2194, %v2201
  %v2218 = vadd.f32 %v2195, %v2201
  %2219 = vst.msk [vmem:[%s3] sm:$0xff] %vm80, %v2203
  %2220 = vst.msk [vmem:[%s3 + $0x8] sm:$0xff] %vm80, %v2204
  %2221 = vst.msk [vmem:[%s3 + $0x10] sm:$0xff] %vm80, %v2205
  %2222 = vst.msk [vmem:[%s3 + $0x18] sm:$0xff] %vm80, %v2206
  %2223 = vst.msk [vmem:[%s3 + $0x20] sm:$0xff] %vm80, %v2207
  %2224 = vst.msk [vmem:[%s3 + $0x28] sm:$0xff] %vm80, %v2208
  %2225 = vst.msk [vmem:[%s3 + $0x30] sm:$0xff] %vm80, %v2209
  %2226 = vst.msk [vmem:[%s3 + $0x38] sm:$0xff] %vm80, %v2210
  %2227 = vst.msk [vmem:[%s3 + $0x40] sm:$0xff] %vm80, %v2211
  %2228 = vst.msk [vmem:[%s3 + $0x48] sm:$0xff] %vm80, %v2212
  %2229 = vst.msk [vmem:[%s3 + $0x50] sm:$0xff] %vm80, %v2213
  %2230 = vst.msk [vmem:[%s3 + $0x58] sm:$0xff] %vm80, %v2214
  %2231 = vst.msk [vmem:[%s3 + $0x60] sm:$0xff] %vm80, %v2215
  %2232 = vst.msk [vmem:[%s3 + $0x68] sm:$0xff] %vm80, %v2216
  %2233 = vst.msk [vmem:[%s3 + $0x70] sm:$0xff] %vm80, %v2217
  %2234 = vst.msk [vmem:[%s3 + $0x78] sm:$0xff] %vm80, %v2218
  // Predicated region
  $region14: #{tpu_custom_call.1} parent=0 // pred_check
    _
  $region15: #{tpu_custom_call.1} parent=0 // pred_check_branch
    %2236 = sbr.rel (0) target = $region17
  $region16: #{tpu_custom_call.1} parent=0 // pred_region
    _
  $region17: #{tpu_custom_call.1} parent=0 // pred_fallthru
    _
  // Predicated region
  $region18: #{tpu_custom_call.1} parent=0 // pred_check
    _
  $region19: #{tpu_custom_call.1} parent=0 // pred_check_branch
    %2238 = sbr.rel (0) target = $region21
  $region20: #{tpu_custom_call.1} parent=0 // pred_region
    _
  $region21: #{tpu_custom_call.1} parent=0 // pred_fallthru
    _

</llo_original>
